<compile_context>
chip_gen: v7x
topology: tpu7x:2x2x1
jax: 0.10.0
libtpu: 0.0.40
codegen_flags: <defaults>
</compile_context>

<pallas_src>
import math
import numpy as np
import jax
import jax.numpy as jnp
from jax.experimental import pallas as pl
from jax.experimental.pallas import tpu as pltpu

_EPS = 0.01 / math.pi


def _sigmoid(z):
    # single EUP transcendental (tanh); avoids the logistic's divide on the VPU
    return 0.5 * jnp.tanh(0.5 * z) + 0.5


# ---------------------------------------------------------------------------
# Fused kernel: value + forward-mode (d/dt, d/dx, d2/dx2) through the MLP
# ---------------------------------------------------------------------------
def _fused_pinn_kernel(pts_ref, w0_ref, wm_ref, wl_ref, u_ref, f_ref, h4):
    """Feature on sublanes, points on lanes; the 4 streams stacked along lanes.

    pts_ref : (3, T)        rows = [t, x, 1]; the ones row folds layer-0 bias
    w0_ref  : (H, 3)        [W0 | b0]      (PyTorch (out, in) layout)
    wm_ref  : (L, H, H+1)   [Wi | bi], the L identical hidden layers, stacked
    wl_ref  : (Dout, H+1)   [Wl | bl]      last (linear) layer
    u_ref   : (Dout, T)     network output u
    f_ref   : (Dout, T)     Burgers residual u_t + u*u_x - eps*u_xx
    h4      : (H+1, 4T)     persistent scratch [value | d/dt | d/dx | d2/dx2];
                            row H is 1.0 in value lanes, 0.0 in derivative lanes
                            so every bias rides the MXU contraction for free.
    """
    H = w0_ref.shape[0]
    T = pts_ref.shape[1]

    # bias row of the stream scratch (value lanes = 1, derivative lanes = 0)
    h4[H:H + 1, 0:T] = jnp.ones((1, T), jnp.float32)
    h4[H:H + 1, T:4 * T] = jnp.zeros((1, 3 * T), jnp.float32)

    # --- layer 0: bias folded via the ones row of pts; analytic deriv seeds ---
    z_v = jnp.dot(w0_ref[...], pts_ref[...], preferred_element_type=jnp.float32)
    s = _sigmoid(z_v)
    s1 = s - s * s                       # sigma'
    s2 = s1 - 2.0 * (s * s1)             # sigma''
    wt = w0_ref[:, 0:1]                  # dz/dt seed column  (H, 1)
    wx = w0_ref[:, 1:2]                  # dz/dx seed column  (H, 1)
    h4[0:H, 0:T] = s
    h4[0:H, T:2 * T] = s1 * wt           # implicit (H,1)x(H,T) broadcast
    h4[0:H, 2 * T:3 * T] = s1 * wx
    h4[0:H, 3 * T:4 * T] = s2 * (wx * wx)   # z_xx == 0 at layer 0

    # --- hidden layers: one MXU dot per layer, results written in place ------
    for i in range(wm_ref.shape[0]):     # static unroll
        z4 = jnp.dot(wm_ref[i], h4[...], preferred_element_type=jnp.float32)
        z_v = z4[:, 0:T]
        z_t = z4[:, T:2 * T]
        z_x = z4[:, 2 * T:3 * T]
        z_xx = z4[:, 3 * T:4 * T]
        s = _sigmoid(z_v)
        s1 = s - s * s
        s2 = s1 - 2.0 * (s * s1)
        h4[0:H, 0:T] = s
        h4[0:H, T:2 * T] = s1 * z_t
        h4[0:H, 2 * T:3 * T] = s1 * z_x
        h4[0:H, 3 * T:4 * T] = s2 * (z_x * z_x) + s1 * z_xx

    # --- last (linear) layer + Burgers residual -------------------------------
    z4 = jnp.dot(wl_ref[...], h4[...], preferred_element_type=jnp.float32)
    u = z4[:, 0:T]                       # bias already folded in
    u_t = z4[:, T:2 * T]
    u_x = z4[:, 2 * T:3 * T]
    u_xx = z4[:, 3 * T:4 * T]
    u_ref[...] = u
    f_ref[...] = u_t + u * u_x - _EPS * u_xx


# ---------------------------------------------------------------------------
# Value-only kernel for the p_bc=None path (single stream, same bias folding)
# ---------------------------------------------------------------------------
def _value_pinn_kernel(pts_ref, w0_ref, wm_ref, wl_ref, u_ref, hbuf):
    H = w0_ref.shape[0]
    T = pts_ref.shape[1]
    hbuf[H:H + 1, :] = jnp.ones((1, T), jnp.float32)   # bias row
    z = jnp.dot(w0_ref[...], pts_ref[...], preferred_element_type=jnp.float32)
    hbuf[0:H, :] = _sigmoid(z)
    for i in range(wm_ref.shape[0]):                   # static unroll
        z = jnp.dot(wm_ref[i], hbuf[...], preferred_element_type=jnp.float32)
        hbuf[0:H, :] = _sigmoid(z)
    u_ref[...] = jnp.dot(wl_ref[...], hbuf[...], preferred_element_type=jnp.float32)


# ---------------------------------------------------------------------------
# Wrappers
# ---------------------------------------------------------------------------
def _round_up(n, m):
    return ((n + m - 1) // m) * m


def _choose_tiling(n, cap_lanes=1024):
    """Pad N to a multiple of 128; pick the largest 128-multiple tile that
    divides the padded size (no tail-padding blowup), capped at `cap_lanes`,
    keeping grid >= 2 whenever >= 256 padded points so v7x's second TensorCore
    gets work under dimension_semantics=("parallel",)."""
    n_pad = _round_up(max(n, 1), 128)
    nt = n_pad // 128
    cap = max(1, cap_lanes // 128)
    best = 1
    for d in range(1, nt + 1):
        if nt % d != 0 or d > cap:
            continue
        if nt >= 2 and nt // d < 2:
            continue
        best = d
    tile = best * 128
    return n_pad, tile, n_pad // tile


def _pack_params(params):
    """params: list of (w(out,in), b(out,)) -> bias-augmented weight slabs."""
    w0, b0 = params[0]
    wl, bl = params[-1]
    w0a = jnp.concatenate([w0, b0[:, None]], axis=1).astype(jnp.float32)        # (H, 3)
    wma = jnp.stack([jnp.concatenate([w, b[:, None]], axis=1)
                     for (w, b) in params[1:-1]]).astype(jnp.float32)           # (L, H, H+1)
    wla = jnp.concatenate([wl, bl[:, None]], axis=1).astype(jnp.float32)        # (Dout, H+1)
    return w0a, wma, wla


def _prep_points(pts, n_pad):
    """(N, 2) -> (3, n_pad) with rows [t, x, 1] (feature-on-sublane layout)."""
    n = pts.shape[0]
    pts_t = jnp.zeros((3, n_pad), jnp.float32)
    pts_t = pts_t.at[2, :].set(1.0)
    pts_t = pts_t.at[:2, :n].set(pts.astype(jnp.float32).T)
    return pts_t


def _run_fused(packed, pts):
    """pts: (N, 2) -> (u (N, Dout), f (N, Dout)) with ONE pallas_call."""
    w0a, wma, wla = packed
    h = w0a.shape[0]
    dout = wla.shape[0]
    l_mid = wma.shape[0]
    n = pts.shape[0]
    n_pad, tile, grid = _choose_tiling(n)
    pts_t = _prep_points(pts, n_pad)

    res2 = lambda i: (0, 0)
    res3 = lambda i: (0, 0, 0)
    u_out, f_out = pl.pallas_call(
        _fused_pinn_kernel,
        out_shape=(jax.ShapeDtypeStruct((dout, n_pad), jnp.float32),
                   jax.ShapeDtypeStruct((dout, n_pad), jnp.float32)),
        grid=(grid,),
        in_specs=[
            pl.BlockSpec((3, tile), lambda i: (0, i)),       # point tile (pipelined)
            pl.BlockSpec((h, 3), res2),                      # weights stay resident
            pl.BlockSpec((l_mid, h, h + 1), res3),
            pl.BlockSpec((dout, h + 1), res2),
        ],
        out_specs=(pl.BlockSpec((dout, tile), lambda i: (0, i)),
                   pl.BlockSpec((dout, tile), lambda i: (0, i))),
        scratch_shapes=[pltpu.VMEM((h + 1, 4 * tile), jnp.float32)],
        compiler_params=pltpu.CompilerParams(
            dimension_semantics=("parallel",),
            vmem_limit_bytes=32 * 1024 * 1024),
    )(pts_t, w0a, wma, wla)
    return u_out[:, :n].T, f_out[:, :n].T


def _run_value(packed, pts):
    """pts: (N, 2) -> u (N, Dout), value-only (1-stream) kernel."""
    w0a, wma, wla = packed
    h = w0a.shape[0]
    dout = wla.shape[0]
    l_mid = wma.shape[0]
    n = pts.shape[0]
    n_pad, tile, grid = _choose_tiling(n)
    pts_t = _prep_points(pts, n_pad)

    res2 = lambda i: (0, 0)
    res3 = lambda i: (0, 0, 0)
    u_out = pl.pallas_call(
        _value_pinn_kernel,
        out_shape=jax.ShapeDtypeStruct((dout, n_pad), jnp.float32),
        grid=(grid,),
        in_specs=[
            pl.BlockSpec((3, tile), lambda i: (0, i)),
            pl.BlockSpec((h, 3), res2),
            pl.BlockSpec((l_mid, h, h + 1), res3),
            pl.BlockSpec((dout, h + 1), res2),
        ],
        out_specs=pl.BlockSpec((dout, tile), lambda i: (0, i)),
        scratch_shapes=[pltpu.VMEM((h + 1, tile), jnp.float32)],
        compiler_params=pltpu.CompilerParams(
            dimension_semantics=("parallel",),
            vmem_limit_bytes=32 * 1024 * 1024),
    )(pts_t, w0a, wma, wla)
    return u_out[:, :n].T


def pinn_burgers_forward(params, p, p_bc=None, p_ic=None):
    """Mirrors PINN_Burgers.forward(problem, p, p_bc, p_ic)."""
    packed = _pack_params(params)
    if p_bc is None:
        return _run_value(packed, p)            # value-only path: 1 stream
    n, nb = p.shape[0], p_bc.shape[0]
    pts = jnp.concatenate([p, p_bc, p_ic], axis=0)
    u_all, f_all = _run_fused(packed, pts)      # one fused call for all points
    f = f_all[:n]
    bv_bar = u_all[n:n + nb]
    iv_bar = u_all[n + nb:]
    return f, bv_bar, iv_bar


# ---------------------------------------------------------------------------
# Deterministic parameter init (xavier_normal weights, PyTorch-default biases)
# Weights kept in PyTorch (out, in) layout.
# ---------------------------------------------------------------------------
def init_params(key, dim_in=2, dim_out=1, dim_hidden=10, hidden_layers=8):
    dims = [dim_in] + [dim_hidden] * hidden_layers + [dim_out]
    params = []
    for i in range(len(dims) - 1):
        fan_in, fan_out = dims[i], dims[i + 1]
        key, kw, kb = jax.random.split(key, 3)
        std = math.sqrt(2.0 / (fan_in + fan_out))
        w = std * jax.random.normal(kw, (fan_out, fan_in), jnp.float32)   # (out, in)
        bound = 1.0 / math.sqrt(fan_in)
        b = jax.random.uniform(kb, (fan_out,), jnp.float32, -bound, bound)
        params.append((w, b))
    return params


# ---------------------------------------------------------------------------
# Pure-JAX reference (autodiff) to validate the in-kernel derivative chain
# ---------------------------------------------------------------------------
def _mlp_ref(params, x):
    h = x
    for i, (w, b) in enumerate(params):
        z = h @ w.T + b
        h = jax.nn.sigmoid(z) if i < len(params) - 1 else z
    return h


def _residual_ref(params, p):
    def u_scalar(pt):
        return _mlp_ref(params, pt[None, :])[0, 0]

    u = jax.vmap(u_scalar)(p)                                    # (N,)
    g = jax.vmap(jax.grad(u_scalar))(p)                          # (N, 2)
    u_t, u_x = g[:, 0], g[:, 1]
    u_xx = jax.vmap(jax.grad(lambda pt: jax.grad(u_scalar)(pt)[1]))(p)[:, 1]
    return (u_t + u * u_x - _EPS * u_xx)[:, None]


# ---------------------------------------------------------------------------
if __name__ == "__main__":
    key = jax.random.PRNGKey(0)
    k_params, k_p, k_bc, k_ic = jax.random.split(key, 4)

    params = init_params(k_params, dim_in=2, dim_out=1, dim_hidden=10, hidden_layers=8)

    N, N_BC, N_IC = 64, 16, 16
    # collocation points (t in [0,1], x in [-1,1])
    p = jax.random.uniform(k_p, (N, 2), jnp.float32)
    p = p.at[:, 1].set(p[:, 1] * 2.0 - 1.0)
    p_bc = jax.random.uniform(k_bc, (N_BC, 2), jnp.float32)
    p_ic = jax.random.uniform(k_ic, (N_IC, 2), jnp.float32)

    f, bv_bar, iv_bar = pinn_burgers_forward(params, p, p_bc, p_ic)
    u_only = pinn_burgers_forward(params, p)                     # p_bc=None path
    jax.block_until_ready((f, bv_bar, iv_bar, u_only))

    # sanity check vs. pure-JAX autodiff reference
    f_ref = _residual_ref(params, p)
    bv_ref = _mlp_ref(params, p_bc)
    iv_ref = _mlp_ref(params, p_ic)
    u_ref = _mlp_ref(params, p)
    np.testing.assert_allclose(np.asarray(f), np.asarray(f_ref), rtol=2e-4, atol=2e-5)
    np.testing.assert_allclose(np.asarray(bv_bar), np.asarray(bv_ref), rtol=2e-4, atol=2e-5)
    np.testing.assert_allclose(np.asarray(iv_bar), np.asarray(iv_ref), rtol=2e-4, atol=2e-5)
    np.testing.assert_allclose(np.asarray(u_only), np.asarray(u_ref), rtol=2e-4, atol=2e-5)

    assert f.shape == (N, 1) and bv_bar.shape == (N_BC, 1) and iv_bar.shape == (N_IC, 1)
    assert u_only.shape == (N, 1)
    print("KERNEL_OK")
</pallas_src>

<mosaic_0001>
module attributes {stable_mosaic.version = 11 : i64} {
  func.func @_fused_pinn_kernel(%arg0: i32, %arg1: memref<3x128xf32, #tpu.memory_space<vmem>>, %arg2: memref<10x3xf32, #tpu.memory_space<vmem>>, %arg3: memref<7x10x11xf32, #tpu.memory_space<vmem>>, %arg4: memref<1x11xf32, #tpu.memory_space<vmem>>, %arg5: memref<1x128xf32, #tpu.memory_space<vmem>>, %arg6: memref<1x128xf32, #tpu.memory_space<vmem>>, %arg7: memref<11x512xf32, #tpu.memory_space<vmem>>) attributes {dimension_semantics = [#tpu.dimension_semantics<parallel>], iteration_bounds = array<i64: 1>, scalar_prefetch = 0 : i64, scratch_operands = 1 : i64, tpu.core_type = #tpu.core_type<tc>, window_params = [{transform_indices = @transform_0, window_bounds = array<i64: 3, 128>}, {pipeline_mode = #tpu.pipeline_mode<synchronous>, transform_indices = @transform_1, window_bounds = array<i64: 10, 3>}, {pipeline_mode = #tpu.pipeline_mode<synchronous>, transform_indices = @transform_2, window_bounds = array<i64: 7, 10, 11>}, {pipeline_mode = #tpu.pipeline_mode<synchronous>, transform_indices = @transform_3, window_bounds = array<i64: 1, 11>}, {transform_indices = @transform_4, window_bounds = array<i64: 1, 128>}, {transform_indices = @transform_5, window_bounds = array<i64: 1, 128>}]} {
    %cst = arith.constant 1.000000e+00 : f32
    %0 = vector.broadcast %cst : f32 to vector<1x128xf32>
    %c10 = arith.constant 10 : index
    %c0 = arith.constant 0 : index
    %1 = vector.load %arg7[%c10, %c0] : memref<11x512xf32, #tpu.memory_space<vmem>>, vector<1x128xf32>
    tpu.vector_store %arg7[%c10, %c0], %0 {strides = array<i32>} : memref<11x512xf32, #tpu.memory_space<vmem>>, vector<1x128xf32>,
    %cst_0 = arith.constant 0.000000e+00 : f32
    %2 = vector.broadcast %cst_0 : f32 to vector<1x384xf32>
    %c10_1 = arith.constant 10 : index
    %c128 = arith.constant 128 : index
    %3 = vector.load %arg7[%c10_1, %c128] : memref<11x512xf32, #tpu.memory_space<vmem>>, vector<1x384xf32>
    tpu.vector_store %arg7[%c10_1, %c128], %2 {strides = array<i32>} : memref<11x512xf32, #tpu.memory_space<vmem>>, vector<1x384xf32>,
    %c0_2 = arith.constant 0 : index
    %c0_3 = arith.constant 0 : index
    %4 = vector.load %arg2[%c0_2, %c0_3] : memref<10x3xf32, #tpu.memory_space<vmem>>, vector<10x3xf32>
    %c0_4 = arith.constant 0 : index
    %c0_5 = arith.constant 0 : index
    %5 = vector.load %arg1[%c0_4, %c0_5] : memref<3x128xf32, #tpu.memory_space<vmem>>, vector<3x128xf32>
    %cst_6 = arith.constant dense<0.000000e+00> : vector<10x128xf32>
    %6 = tpu.matmul %4, %5, %cst_6 {dimension_numbers = #tpu.dot_dimension_numbers<[1], [0], [0], [1], [0, 0, 1, 1], [], []>} : vector<10x3xf32>, vector<3x128xf32>, vector<10x128xf32> -> vector<10x128xf32>
    %cst_7 = arith.constant 5.000000e-01 : f32
    %7 = vector.broadcast %cst_7 : f32 to vector<10x128xf32>
    %8 = arith.mulf %7, %6 : vector<10x128xf32>
    %9 = math.tanh %8 : vector<10x128xf32>
    %cst_8 = arith.constant 5.000000e-01 : f32
    %10 = vector.broadcast %cst_8 : f32 to vector<10x128xf32>
    %11 = arith.mulf %10, %9 : vector<10x128xf32>
    %cst_9 = arith.constant 5.000000e-01 : f32
    %12 = vector.broadcast %cst_9 : f32 to vector<10x128xf32>
    %13 = arith.addf %11, %12 : vector<10x128xf32>
    %14 = arith.mulf %13, %13 : vector<10x128xf32>
    %15 = arith.subf %13, %14 : vector<10x128xf32>
    %16 = arith.mulf %13, %15 : vector<10x128xf32>
    %cst_10 = arith.constant 2.000000e+00 : f32
    %17 = vector.broadcast %cst_10 : f32 to vector<10x128xf32>
    %18 = arith.mulf %17, %16 : vector<10x128xf32>
    %19 = arith.subf %15, %18 : vector<10x128xf32>
    %c0_11 = arith.constant 0 : index
    %c0_12 = arith.constant 0 : index
    %20 = vector.load %arg2[%c0_11, %c0_12] : memref<10x3xf32, #tpu.memory_space<vmem>>, vector<10x1xf32>
    %c0_13 = arith.constant 0 : index
    %c1 = arith.constant 1 : index
    %21 = vector.load %arg2[%c0_13, %c1] : memref<10x3xf32, #tpu.memory_space<vmem>>, vector<10x1xf32>
    %c0_14 = arith.constant 0 : index
    %c0_15 = arith.constant 0 : index
    %22 = vector.load %arg7[%c0_14, %c0_15] : memref<11x512xf32, #tpu.memory_space<vmem>>, vector<10x128xf32>
    tpu.vector_store %arg7[%c0_14, %c0_15], %13 {strides = array<i32>} : memref<11x512xf32, #tpu.memory_space<vmem>>, vector<10x128xf32>,
    %23 = vector.broadcast %20 : vector<10x1xf32> to vector<10x128xf32>
    %24 = arith.mulf %15, %23 : vector<10x128xf32>
    %c0_16 = arith.constant 0 : index
    %c128_17 = arith.constant 128 : index
    %25 = vector.load %arg7[%c0_16, %c128_17] : memref<11x512xf32, #tpu.memory_space<vmem>>, vector<10x128xf32>
    tpu.vector_store %arg7[%c0_16, %c128_17], %24 {strides = array<i32>} : memref<11x512xf32, #tpu.memory_space<vmem>>, vector<10x128xf32>,
    %26 = vector.broadcast %21 : vector<10x1xf32> to vector<10x128xf32>
    %27 = arith.mulf %15, %26 : vector<10x128xf32>
    %c0_18 = arith.constant 0 : index
    %c256 = arith.constant 256 : index
    %28 = vector.load %arg7[%c0_18, %c256] : memref<11x512xf32, #tpu.memory_space<vmem>>, vector<10x128xf32>
    tpu.vector_store %arg7[%c0_18, %c256], %27 {strides = array<i32>} : memref<11x512xf32, #tpu.memory_space<vmem>>, vector<10x128xf32>,
    %29 = arith.mulf %21, %21 : vector<10x1xf32>
    %30 = vector.broadcast %29 : vector<10x1xf32> to vector<10x128xf32>
    %31 = arith.mulf %19, %30 : vector<10x128xf32>
    %c0_19 = arith.constant 0 : index
    %c384 = arith.constant 384 : index
    %32 = vector.load %arg7[%c0_19, %c384] : memref<11x512xf32, #tpu.memory_space<vmem>>, vector<10x128xf32>
    tpu.vector_store %arg7[%c0_19, %c384], %31 {strides = array<i32>} : memref<11x512xf32, #tpu.memory_space<vmem>>, vector<10x128xf32>,
    %c0_20 = arith.constant 0 : index
    %c0_21 = arith.constant 0 : index
    %c0_22 = arith.constant 0 : index
    %33 = vector.load %arg3[%c0_20, %c0_21, %c0_22] : memref<7x10x11xf32, #tpu.memory_space<vmem>>, vector<1x10x11xf32>
    %34 = vector.shape_cast %33 : vector<1x10x11xf32> to vector<10x11xf32>
    %c0_23 = arith.constant 0 : index
    %c0_24 = arith.constant 0 : index
    %35 = vector.load %arg7[%c0_23, %c0_24] : memref<11x512xf32, #tpu.memory_space<vmem>>, vector<11x512xf32>
    %cst_25 = arith.constant dense<0.000000e+00> : vector<10x512xf32>
    %36 = tpu.matmul %34, %35, %cst_25 {dimension_numbers = #tpu.dot_dimension_numbers<[1], [0], [0], [1], [0, 0, 1, 1], [], []>} : vector<10x11xf32>, vector<11x512xf32>, vector<10x512xf32> -> vector<10x512xf32>
    %37 = vector.extract_strided_slice %36 {offsets = [0, 0], sizes = [10, 128], strides = [1, 1]} : vector<10x512xf32> to vector<10x128xf32>
    %38 = vector.extract_strided_slice %36 {offsets = [0, 128], sizes = [10, 128], strides = [1, 1]} : vector<10x512xf32> to vector<10x128xf32>
    %39 = vector.extract_strided_slice %36 {offsets = [0, 256], sizes = [10, 128], strides = [1, 1]} : vector<10x512xf32> to vector<10x128xf32>
    %40 = vector.extract_strided_slice %36 {offsets = [0, 384], sizes = [10, 128], strides = [1, 1]} : vector<10x512xf32> to vector<10x128xf32>
    %cst_26 = arith.constant 5.000000e-01 : f32
    %41 = vector.broadcast %cst_26 : f32 to vector<10x128xf32>
    %42 = arith.mulf %41, %37 : vector<10x128xf32>
    %43 = math.tanh %42 : vector<10x128xf32>
    %cst_27 = arith.constant 5.000000e-01 : f32
    %44 = vector.broadcast %cst_27 : f32 to vector<10x128xf32>
    %45 = arith.mulf %44, %43 : vector<10x128xf32>
    %cst_28 = arith.constant 5.000000e-01 : f32
    %46 = vector.broadcast %cst_28 : f32 to vector<10x128xf32>
    %47 = arith.addf %45, %46 : vector<10x128xf32>
    %48 = arith.mulf %47, %47 : vector<10x128xf32>
    %49 = arith.subf %47, %48 : vector<10x128xf32>
    %50 = arith.mulf %47, %49 : vector<10x128xf32>
    %cst_29 = arith.constant 2.000000e+00 : f32
    %51 = vector.broadcast %cst_29 : f32 to vector<10x128xf32>
    %52 = arith.mulf %51, %50 : vector<10x128xf32>
    %53 = arith.subf %49, %52 : vector<10x128xf32>
    %c0_30 = arith.constant 0 : index
    %c0_31 = arith.constant 0 : index
    %54 = vector.load %arg7[%c0_30, %c0_31] : memref<11x512xf32, #tpu.memory_space<vmem>>, vector<10x128xf32>
    tpu.vector_store %arg7[%c0_30, %c0_31], %47 {strides = array<i32>} : memref<11x512xf32, #tpu.memory_space<vmem>>, vector<10x128xf32>,
    %55 = arith.mulf %49, %38 : vector<10x128xf32>
    %c0_32 = arith.constant 0 : index
    %c128_33 = arith.constant 128 : index
    %56 = vector.load %arg7[%c0_32, %c128_33] : memref<11x512xf32, #tpu.memory_space<vmem>>, vector<10x128xf32>
    tpu.vector_store %arg7[%c0_32, %c128_33], %55 {strides = array<i32>} : memref<11x512xf32, #tpu.memory_space<vmem>>, vector<10x128xf32>,
    %57 = arith.mulf %49, %39 : vector<10x128xf32>
    %c0_34 = arith.constant 0 : index
    %c256_35 = arith.constant 256 : index
    %58 = vector.load %arg7[%c0_34, %c256_35] : memref<11x512xf32, #tpu.memory_space<vmem>>, vector<10x128xf32>
    tpu.vector_store %arg7[%c0_34, %c256_35], %57 {strides = array<i32>} : memref<11x512xf32, #tpu.memory_space<vmem>>, vector<10x128xf32>,
    %59 = arith.mulf %39, %39 : vector<10x128xf32>
    %60 = arith.mulf %53, %59 : vector<10x128xf32>
    %61 = arith.mulf %49, %40 : vector<10x128xf32>
    %62 = arith.addf %60, %61 : vector<10x128xf32>
    %c0_36 = arith.constant 0 : index
    %c384_37 = arith.constant 384 : index
    %63 = vector.load %arg7[%c0_36, %c384_37] : memref<11x512xf32, #tpu.memory_space<vmem>>, vector<10x128xf32>
    tpu.vector_store %arg7[%c0_36, %c384_37], %62 {strides = array<i32>} : memref<11x512xf32, #tpu.memory_space<vmem>>, vector<10x128xf32>,
    %c1_38 = arith.constant 1 : index
    %c0_39 = arith.constant 0 : index
    %c0_40 = arith.constant 0 : index
    %64 = vector.load %arg3[%c1_38, %c0_39, %c0_40] : memref<7x10x11xf32, #tpu.memory_space<vmem>>, vector<1x10x11xf32>
    %65 = vector.shape_cast %64 : vector<1x10x11xf32> to vector<10x11xf32>
    %c0_41 = arith.constant 0 : index
    %c0_42 = arith.constant 0 : index
    %66 = vector.load %arg7[%c0_41, %c0_42] : memref<11x512xf32, #tpu.memory_space<vmem>>, vector<11x512xf32>
    %cst_43 = arith.constant dense<0.000000e+00> : vector<10x512xf32>
    %67 = tpu.matmul %65, %66, %cst_43 {dimension_numbers = #tpu.dot_dimension_numbers<[1], [0], [0], [1], [0, 0, 1, 1], [], []>} : vector<10x11xf32>, vector<11x512xf32>, vector<10x512xf32> -> vector<10x512xf32>
    %68 = vector.extract_strided_slice %67 {offsets = [0, 0], sizes = [10, 128], strides = [1, 1]} : vector<10x512xf32> to vector<10x128xf32>
    %69 = vector.extract_strided_slice %67 {offsets = [0, 128], sizes = [10, 128], strides = [1, 1]} : vector<10x512xf32> to vector<10x128xf32>
    %70 = vector.extract_strided_slice %67 {offsets = [0, 256], sizes = [10, 128], strides = [1, 1]} : vector<10x512xf32> to vector<10x128xf32>
    %71 = vector.extract_strided_slice %67 {offsets = [0, 384], sizes = [10, 128], strides = [1, 1]} : vector<10x512xf32> to vector<10x128xf32>
    %cst_44 = arith.constant 5.000000e-01 : f32
    %72 = vector.broadcast %cst_44 : f32 to vector<10x128xf32>
    %73 = arith.mulf %72, %68 : vector<10x128xf32>
    %74 = math.tanh %73 : vector<10x128xf32>
    %cst_45 = arith.constant 5.000000e-01 : f32
    %75 = vector.broadcast %cst_45 : f32 to vector<10x128xf32>
    %76 = arith.mulf %75, %74 : vector<10x128xf32>
    %cst_46 = arith.constant 5.000000e-01 : f32
    %77 = vector.broadcast %cst_46 : f32 to vector<10x128xf32>
    %78 = arith.addf %76, %77 : vector<10x128xf32>
    %79 = arith.mulf %78, %78 : vector<10x128xf32>
    %80 = arith.subf %78, %79 : vector<10x128xf32>
    %81 = arith.mulf %78, %80 : vector<10x128xf32>
    %cst_47 = arith.constant 2.000000e+00 : f32
    %82 = vector.broadcast %cst_47 : f32 to vector<10x128xf32>
    %83 = arith.mulf %82, %81 : vector<10x128xf32>
    %84 = arith.subf %80, %83 : vector<10x128xf32>
    %c0_48 = arith.constant 0 : index
    %c0_49 = arith.constant 0 : index
    %85 = vector.load %arg7[%c0_48, %c0_49] : memref<11x512xf32, #tpu.memory_space<vmem>>, vector<10x128xf32>
    tpu.vector_store %arg7[%c0_48, %c0_49], %78 {strides = array<i32>} : memref<11x512xf32, #tpu.memory_space<vmem>>, vector<10x128xf32>,
    %86 = arith.mulf %80, %69 : vector<10x128xf32>
    %c0_50 = arith.constant 0 : index
    %c128_51 = arith.constant 128 : index
    %87 = vector.load %arg7[%c0_50, %c128_51] : memref<11x512xf32, #tpu.memory_space<vmem>>, vector<10x128xf32>
    tpu.vector_store %arg7[%c0_50, %c128_51], %86 {strides = array<i32>} : memref<11x512xf32, #tpu.memory_space<vmem>>, vector<10x128xf32>,
    %88 = arith.mulf %80, %70 : vector<10x128xf32>
    %c0_52 = arith.constant 0 : index
    %c256_53 = arith.constant 256 : index
    %89 = vector.load %arg7[%c0_52, %c256_53] : memref<11x512xf32, #tpu.memory_space<vmem>>, vector<10x128xf32>
    tpu.vector_store %arg7[%c0_52, %c256_53], %88 {strides = array<i32>} : memref<11x512xf32, #tpu.memory_space<vmem>>, vector<10x128xf32>,
    %90 = arith.mulf %70, %70 : vector<10x128xf32>
    %91 = arith.mulf %84, %90 : vector<10x128xf32>
    %92 = arith.mulf %80, %71 : vector<10x128xf32>
    %93 = arith.addf %91, %92 : vector<10x128xf32>
    %c0_54 = arith.constant 0 : index
    %c384_55 = arith.constant 384 : index
    %94 = vector.load %arg7[%c0_54, %c384_55] : memref<11x512xf32, #tpu.memory_space<vmem>>, vector<10x128xf32>
    tpu.vector_store %arg7[%c0_54, %c384_55], %93 {strides = array<i32>} : memref<11x512xf32, #tpu.memory_space<vmem>>, vector<10x128xf32>,
    %c2 = arith.constant 2 : index
    %c0_56 = arith.constant 0 : index
    %c0_57 = arith.constant 0 : index
    %95 = vector.load %arg3[%c2, %c0_56, %c0_57] : memref<7x10x11xf32, #tpu.memory_space<vmem>>, vector<1x10x11xf32>
    %96 = vector.shape_cast %95 : vector<1x10x11xf32> to vector<10x11xf32>
    %c0_58 = arith.constant 0 : index
    %c0_59 = arith.constant 0 : index
    %97 = vector.load %arg7[%c0_58, %c0_59] : memref<11x512xf32, #tpu.memory_space<vmem>>, vector<11x512xf32>
    %cst_60 = arith.constant dense<0.000000e+00> : vector<10x512xf32>
    %98 = tpu.matmul %96, %97, %cst_60 {dimension_numbers = #tpu.dot_dimension_numbers<[1], [0], [0], [1], [0, 0, 1, 1], [], []>} : vector<10x11xf32>, vector<11x512xf32>, vector<10x512xf32> -> vector<10x512xf32>
    %99 = vector.extract_strided_slice %98 {offsets = [0, 0], sizes = [10, 128], strides = [1, 1]} : vector<10x512xf32> to vector<10x128xf32>
    %100 = vector.extract_strided_slice %98 {offsets = [0, 128], sizes = [10, 128], strides = [1, 1]} : vector<10x512xf32> to vector<10x128xf32>
    %101 = vector.extract_strided_slice %98 {offsets = [0, 256], sizes = [10, 128], strides = [1, 1]} : vector<10x512xf32> to vector<10x128xf32>
    %102 = vector.extract_strided_slice %98 {offsets = [0, 384], sizes = [10, 128], strides = [1, 1]} : vector<10x512xf32> to vector<10x128xf32>
    %cst_61 = arith.constant 5.000000e-01 : f32
    %103 = vector.broadcast %cst_61 : f32 to vector<10x128xf32>
    %104 = arith.mulf %103, %99 : vector<10x128xf32>
    %105 = math.tanh %104 : vector<10x128xf32>
    %cst_62 = arith.constant 5.000000e-01 : f32
    %106 = vector.broadcast %cst_62 : f32 to vector<10x128xf32>
    %107 = arith.mulf %106, %105 : vector<10x128xf32>
    %cst_63 = arith.constant 5.000000e-01 : f32
    %108 = vector.broadcast %cst_63 : f32 to vector<10x128xf32>
    %109 = arith.addf %107, %108 : vector<10x128xf32>
    %110 = arith.mulf %109, %109 : vector<10x128xf32>
    %111 = arith.subf %109, %110 : vector<10x128xf32>
    %112 = arith.mulf %109, %111 : vector<10x128xf32>
    %cst_64 = arith.constant 2.000000e+00 : f32
    %113 = vector.broadcast %cst_64 : f32 to vector<10x128xf32>
    %114 = arith.mulf %113, %112 : vector<10x128xf32>
    %115 = arith.subf %111, %114 : vector<10x128xf32>
    %c0_65 = arith.constant 0 : index
    %c0_66 = arith.constant 0 : index
    %116 = vector.load %arg7[%c0_65, %c0_66] : memref<11x512xf32, #tpu.memory_space<vmem>>, vector<10x128xf32>
    tpu.vector_store %arg7[%c0_65, %c0_66], %109 {strides = array<i32>} : memref<11x512xf32, #tpu.memory_space<vmem>>, vector<10x128xf32>,
    %117 = arith.mulf %111, %100 : vector<10x128xf32>
    %c0_67 = arith.constant 0 : index
    %c128_68 = arith.constant 128 : index
    %118 = vector.load %arg7[%c0_67, %c128_68] : memref<11x512xf32, #tpu.memory_space<vmem>>, vector<10x128xf32>
    tpu.vector_store %arg7[%c0_67, %c128_68], %117 {strides = array<i32>} : memref<11x512xf32, #tpu.memory_space<vmem>>, vector<10x128xf32>,
    %119 = arith.mulf %111, %101 : vector<10x128xf32>
    %c0_69 = arith.constant 0 : index
    %c256_70 = arith.constant 256 : index
    %120 = vector.load %arg7[%c0_69, %c256_70] : memref<11x512xf32, #tpu.memory_space<vmem>>, vector<10x128xf32>
    tpu.vector_store %arg7[%c0_69, %c256_70], %119 {strides = array<i32>} : memref<11x512xf32, #tpu.memory_space<vmem>>, vector<10x128xf32>,
    %121 = arith.mulf %101, %101 : vector<10x128xf32>
    %122 = arith.mulf %115, %121 : vector<10x128xf32>
    %123 = arith.mulf %111, %102 : vector<10x128xf32>
    %124 = arith.addf %122, %123 : vector<10x128xf32>
    %c0_71 = arith.constant 0 : index
    %c384_72 = arith.constant 384 : index
    %125 = vector.load %arg7[%c0_71, %c384_72] : memref<11x512xf32, #tpu.memory_space<vmem>>, vector<10x128xf32>
    tpu.vector_store %arg7[%c0_71, %c384_72], %124 {strides = array<i32>} : memref<11x512xf32, #tpu.memory_space<vmem>>, vector<10x128xf32>,
    %c3 = arith.constant 3 : index
    %c0_73 = arith.constant 0 : index
    %c0_74 = arith.constant 0 : index
    %126 = vector.load %arg3[%c3, %c0_73, %c0_74] : memref<7x10x11xf32, #tpu.memory_space<vmem>>, vector<1x10x11xf32>
    %127 = vector.shape_cast %126 : vector<1x10x11xf32> to vector<10x11xf32>
    %c0_75 = arith.constant 0 : index
    %c0_76 = arith.constant 0 : index
    %128 = vector.load %arg7[%c0_75, %c0_76] : memref<11x512xf32, #tpu.memory_space<vmem>>, vector<11x512xf32>
    %cst_77 = arith.constant dense<0.000000e+00> : vector<10x512xf32>
    %129 = tpu.matmul %127, %128, %cst_77 {dimension_numbers = #tpu.dot_dimension_numbers<[1], [0], [0], [1], [0, 0, 1, 1], [], []>} : vector<10x11xf32>, vector<11x512xf32>, vector<10x512xf32> -> vector<10x512xf32>
    %130 = vector.extract_strided_slice %129 {offsets = [0, 0], sizes = [10, 128], strides = [1, 1]} : vector<10x512xf32> to vector<10x128xf32>
    %131 = vector.extract_strided_slice %129 {offsets = [0, 128], sizes = [10, 128], strides = [1, 1]} : vector<10x512xf32> to vector<10x128xf32>
    %132 = vector.extract_strided_slice %129 {offsets = [0, 256], sizes = [10, 128], strides = [1, 1]} : vector<10x512xf32> to vector<10x128xf32>
    %133 = vector.extract_strided_slice %129 {offsets = [0, 384], sizes = [10, 128], strides = [1, 1]} : vector<10x512xf32> to vector<10x128xf32>
    %cst_78 = arith.constant 5.000000e-01 : f32
    %134 = vector.broadcast %cst_78 : f32 to vector<10x128xf32>
    %135 = arith.mulf %134, %130 : vector<10x128xf32>
    %136 = math.tanh %135 : vector<10x128xf32>
    %cst_79 = arith.constant 5.000000e-01 : f32
    %137 = vector.broadcast %cst_79 : f32 to vector<10x128xf32>
    %138 = arith.mulf %137, %136 : vector<10x128xf32>
    %cst_80 = arith.constant 5.000000e-01 : f32
    %139 = vector.broadcast %cst_80 : f32 to vector<10x128xf32>
    %140 = arith.addf %138, %139 : vector<10x128xf32>
    %141 = arith.mulf %140, %140 : vector<10x128xf32>
    %142 = arith.subf %140, %141 : vector<10x128xf32>
    %143 = arith.mulf %140, %142 : vector<10x128xf32>
    %cst_81 = arith.constant 2.000000e+00 : f32
    %144 = vector.broadcast %cst_81 : f32 to vector<10x128xf32>
    %145 = arith.mulf %144, %143 : vector<10x128xf32>
    %146 = arith.subf %142, %145 : vector<10x128xf32>
    %c0_82 = arith.constant 0 : index
    %c0_83 = arith.constant 0 : index
    %147 = vector.load %arg7[%c0_82, %c0_83] : memref<11x512xf32, #tpu.memory_space<vmem>>, vector<10x128xf32>
    tpu.vector_store %arg7[%c0_82, %c0_83], %140 {strides = array<i32>} : memref<11x512xf32, #tpu.memory_space<vmem>>, vector<10x128xf32>,
    %148 = arith.mulf %142, %131 : vector<10x128xf32>
    %c0_84 = arith.constant 0 : index
    %c128_85 = arith.constant 128 : index
    %149 = vector.load %arg7[%c0_84, %c128_85] : memref<11x512xf32, #tpu.memory_space<vmem>>, vector<10x128xf32>
    tpu.vector_store %arg7[%c0_84, %c128_85], %148 {strides = array<i32>} : memref<11x512xf32, #tpu.memory_space<vmem>>, vector<10x128xf32>,
    %150 = arith.mulf %142, %132 : vector<10x128xf32>
    %c0_86 = arith.constant 0 : index
    %c256_87 = arith.constant 256 : index
    %151 = vector.load %arg7[%c0_86, %c256_87] : memref<11x512xf32, #tpu.memory_space<vmem>>, vector<10x128xf32>
    tpu.vector_store %arg7[%c0_86, %c256_87], %150 {strides = array<i32>} : memref<11x512xf32, #tpu.memory_space<vmem>>, vector<10x128xf32>,
    %152 = arith.mulf %132, %132 : vector<10x128xf32>
    %153 = arith.mulf %146, %152 : vector<10x128xf32>
    %154 = arith.mulf %142, %133 : vector<10x128xf32>
    %155 = arith.addf %153, %154 : vector<10x128xf32>
    %c0_88 = arith.constant 0 : index
    %c384_89 = arith.constant 384 : index
    %156 = vector.load %arg7[%c0_88, %c384_89] : memref<11x512xf32, #tpu.memory_space<vmem>>, vector<10x128xf32>
    tpu.vector_store %arg7[%c0_88, %c384_89], %155 {strides = array<i32>} : memref<11x512xf32, #tpu.memory_space<vmem>>, vector<10x128xf32>,
    %c4 = arith.constant 4 : index
    %c0_90 = arith.constant 0 : index
    %c0_91 = arith.constant 0 : index
    %157 = vector.load %arg3[%c4, %c0_90, %c0_91] : memref<7x10x11xf32, #tpu.memory_space<vmem>>, vector<1x10x11xf32>
    %158 = vector.shape_cast %157 : vector<1x10x11xf32> to vector<10x11xf32>
    %c0_92 = arith.constant 0 : index
    %c0_93 = arith.constant 0 : index
    %159 = vector.load %arg7[%c0_92, %c0_93] : memref<11x512xf32, #tpu.memory_space<vmem>>, vector<11x512xf32>
    %cst_94 = arith.constant dense<0.000000e+00> : vector<10x512xf32>
    %160 = tpu.matmul %158, %159, %cst_94 {dimension_numbers = #tpu.dot_dimension_numbers<[1], [0], [0], [1], [0, 0, 1, 1], [], []>} : vector<10x11xf32>, vector<11x512xf32>, vector<10x512xf32> -> vector<10x512xf32>
    %161 = vector.extract_strided_slice %160 {offsets = [0, 0], sizes = [10, 128], strides = [1, 1]} : vector<10x512xf32> to vector<10x128xf32>
    %162 = vector.extract_strided_slice %160 {offsets = [0, 128], sizes = [10, 128], strides = [1, 1]} : vector<10x512xf32> to vector<10x128xf32>
    %163 = vector.extract_strided_slice %160 {offsets = [0, 256], sizes = [10, 128], strides = [1, 1]} : vector<10x512xf32> to vector<10x128xf32>
    %164 = vector.extract_strided_slice %160 {offsets = [0, 384], sizes = [10, 128], strides = [1, 1]} : vector<10x512xf32> to vector<10x128xf32>
    %cst_95 = arith.constant 5.000000e-01 : f32
    %165 = vector.broadcast %cst_95 : f32 to vector<10x128xf32>
    %166 = arith.mulf %165, %161 : vector<10x128xf32>
    %167 = math.tanh %166 : vector<10x128xf32>
    %cst_96 = arith.constant 5.000000e-01 : f32
    %168 = vector.broadcast %cst_96 : f32 to vector<10x128xf32>
    %169 = arith.mulf %168, %167 : vector<10x128xf32>
    %cst_97 = arith.constant 5.000000e-01 : f32
    %170 = vector.broadcast %cst_97 : f32 to vector<10x128xf32>
    %171 = arith.addf %169, %170 : vector<10x128xf32>
    %172 = arith.mulf %171, %171 : vector<10x128xf32>
    %173 = arith.subf %171, %172 : vector<10x128xf32>
    %174 = arith.mulf %171, %173 : vector<10x128xf32>
    %cst_98 = arith.constant 2.000000e+00 : f32
    %175 = vector.broadcast %cst_98 : f32 to vector<10x128xf32>
    %176 = arith.mulf %175, %174 : vector<10x128xf32>
    %177 = arith.subf %173, %176 : vector<10x128xf32>
    %c0_99 = arith.constant 0 : index
    %c0_100 = arith.constant 0 : index
    %178 = vector.load %arg7[%c0_99, %c0_100] : memref<11x512xf32, #tpu.memory_space<vmem>>, vector<10x128xf32>
    tpu.vector_store %arg7[%c0_99, %c0_100], %171 {strides = array<i32>} : memref<11x512xf32, #tpu.memory_space<vmem>>, vector<10x128xf32>,
    %179 = arith.mulf %173, %162 : vector<10x128xf32>
    %c0_101 = arith.constant 0 : index
    %c128_102 = arith.constant 128 : index
    %180 = vector.load %arg7[%c0_101, %c128_102] : memref<11x512xf32, #tpu.memory_space<vmem>>, vector<10x128xf32>
    tpu.vector_store %arg7[%c0_101, %c128_102], %179 {strides = array<i32>} : memref<11x512xf32, #tpu.memory_space<vmem>>, vector<10x128xf32>,
    %181 = arith.mulf %173, %163 : vector<10x128xf32>
    %c0_103 = arith.constant 0 : index
    %c256_104 = arith.constant 256 : index
    %182 = vector.load %arg7[%c0_103, %c256_104] : memref<11x512xf32, #tpu.memory_space<vmem>>, vector<10x128xf32>
    tpu.vector_store %arg7[%c0_103, %c256_104], %181 {strides = array<i32>} : memref<11x512xf32, #tpu.memory_space<vmem>>, vector<10x128xf32>,
    %183 = arith.mulf %163, %163 : vector<10x128xf32>
    %184 = arith.mulf %177, %183 : vector<10x128xf32>
    %185 = arith.mulf %173, %164 : vector<10x128xf32>
    %186 = arith.addf %184, %185 : vector<10x128xf32>
    %c0_105 = arith.constant 0 : index
    %c384_106 = arith.constant 384 : index
    %187 = vector.load %arg7[%c0_105, %c384_106] : memref<11x512xf32, #tpu.memory_space<vmem>>, vector<10x128xf32>
    tpu.vector_store %arg7[%c0_105, %c384_106], %186 {strides = array<i32>} : memref<11x512xf32, #tpu.memory_space<vmem>>, vector<10x128xf32>,
    %c5 = arith.constant 5 : index
    %c0_107 = arith.constant 0 : index
    %c0_108 = arith.constant 0 : index
    %188 = vector.load %arg3[%c5, %c0_107, %c0_108] : memref<7x10x11xf32, #tpu.memory_space<vmem>>, vector<1x10x11xf32>
    %189 = vector.shape_cast %188 : vector<1x10x11xf32> to vector<10x11xf32>
    %c0_109 = arith.constant 0 : index
    %c0_110 = arith.constant 0 : index
    %190 = vector.load %arg7[%c0_109, %c0_110] : memref<11x512xf32, #tpu.memory_space<vmem>>, vector<11x512xf32>
    %cst_111 = arith.constant dense<0.000000e+00> : vector<10x512xf32>
    %191 = tpu.matmul %189, %190, %cst_111 {dimension_numbers = #tpu.dot_dimension_numbers<[1], [0], [0], [1], [0, 0, 1, 1], [], []>} : vector<10x11xf32>, vector<11x512xf32>, vector<10x512xf32> -> vector<10x512xf32>
    %192 = vector.extract_strided_slice %191 {offsets = [0, 0], sizes = [10, 128], strides = [1, 1]} : vector<10x512xf32> to vector<10x128xf32>
    %193 = vector.extract_strided_slice %191 {offsets = [0, 128], sizes = [10, 128], strides = [1, 1]} : vector<10x512xf32> to vector<10x128xf32>
    %194 = vector.extract_strided_slice %191 {offsets = [0, 256], sizes = [10, 128], strides = [1, 1]} : vector<10x512xf32> to vector<10x128xf32>
    %195 = vector.extract_strided_slice %191 {offsets = [0, 384], sizes = [10, 128], strides = [1, 1]} : vector<10x512xf32> to vector<10x128xf32>
    %cst_112 = arith.constant 5.000000e-01 : f32
    %196 = vector.broadcast %cst_112 : f32 to vector<10x128xf32>
    %197 = arith.mulf %196, %192 : vector<10x128xf32>
    %198 = math.tanh %197 : vector<10x128xf32>
    %cst_113 = arith.constant 5.000000e-01 : f32
    %199 = vector.broadcast %cst_113 : f32 to vector<10x128xf32>
    %200 = arith.mulf %199, %198 : vector<10x128xf32>
    %cst_114 = arith.constant 5.000000e-01 : f32
    %201 = vector.broadcast %cst_114 : f32 to vector<10x128xf32>
    %202 = arith.addf %200, %201 : vector<10x128xf32>
    %203 = arith.mulf %202, %202 : vector<10x128xf32>
    %204 = arith.subf %202, %203 : vector<10x128xf32>
    %205 = arith.mulf %202, %204 : vector<10x128xf32>
    %cst_115 = arith.constant 2.000000e+00 : f32
    %206 = vector.broadcast %cst_115 : f32 to vector<10x128xf32>
    %207 = arith.mulf %206, %205 : vector<10x128xf32>
    %208 = arith.subf %204, %207 : vector<10x128xf32>
    %c0_116 = arith.constant 0 : index
    %c0_117 = arith.constant 0 : index
    %209 = vector.load %arg7[%c0_116, %c0_117] : memref<11x512xf32, #tpu.memory_space<vmem>>, vector<10x128xf32>
    tpu.vector_store %arg7[%c0_116, %c0_117], %202 {strides = array<i32>} : memref<11x512xf32, #tpu.memory_space<vmem>>, vector<10x128xf32>,
    %210 = arith.mulf %204, %193 : vector<10x128xf32>
    %c0_118 = arith.constant 0 : index
    %c128_119 = arith.constant 128 : index
    %211 = vector.load %arg7[%c0_118, %c128_119] : memref<11x512xf32, #tpu.memory_space<vmem>>, vector<10x128xf32>
    tpu.vector_store %arg7[%c0_118, %c128_119], %210 {strides = array<i32>} : memref<11x512xf32, #tpu.memory_space<vmem>>, vector<10x128xf32>,
    %212 = arith.mulf %204, %194 : vector<10x128xf32>
    %c0_120 = arith.constant 0 : index
    %c256_121 = arith.constant 256 : index
    %213 = vector.load %arg7[%c0_120, %c256_121] : memref<11x512xf32, #tpu.memory_space<vmem>>, vector<10x128xf32>
    tpu.vector_store %arg7[%c0_120, %c256_121], %212 {strides = array<i32>} : memref<11x512xf32, #tpu.memory_space<vmem>>, vector<10x128xf32>,
    %214 = arith.mulf %194, %194 : vector<10x128xf32>
    %215 = arith.mulf %208, %214 : vector<10x128xf32>
    %216 = arith.mulf %204, %195 : vector<10x128xf32>
    %217 = arith.addf %215, %216 : vector<10x128xf32>
    %c0_122 = arith.constant 0 : index
    %c384_123 = arith.constant 384 : index
    %218 = vector.load %arg7[%c0_122, %c384_123] : memref<11x512xf32, #tpu.memory_space<vmem>>, vector<10x128xf32>
    tpu.vector_store %arg7[%c0_122, %c384_123], %217 {strides = array<i32>} : memref<11x512xf32, #tpu.memory_space<vmem>>, vector<10x128xf32>,
    %c6 = arith.constant 6 : index
    %c0_124 = arith.constant 0 : index
    %c0_125 = arith.constant 0 : index
    %219 = vector.load %arg3[%c6, %c0_124, %c0_125] : memref<7x10x11xf32, #tpu.memory_space<vmem>>, vector<1x10x11xf32>
    %220 = vector.shape_cast %219 : vector<1x10x11xf32> to vector<10x11xf32>
    %c0_126 = arith.constant 0 : index
    %c0_127 = arith.constant 0 : index
    %221 = vector.load %arg7[%c0_126, %c0_127] : memref<11x512xf32, #tpu.memory_space<vmem>>, vector<11x512xf32>
    %cst_128 = arith.constant dense<0.000000e+00> : vector<10x512xf32>
    %222 = tpu.matmul %220, %221, %cst_128 {dimension_numbers = #tpu.dot_dimension_numbers<[1], [0], [0], [1], [0, 0, 1, 1], [], []>} : vector<10x11xf32>, vector<11x512xf32>, vector<10x512xf32> -> vector<10x512xf32>
    %223 = vector.extract_strided_slice %222 {offsets = [0, 0], sizes = [10, 128], strides = [1, 1]} : vector<10x512xf32> to vector<10x128xf32>
    %224 = vector.extract_strided_slice %222 {offsets = [0, 128], sizes = [10, 128], strides = [1, 1]} : vector<10x512xf32> to vector<10x128xf32>
    %225 = vector.extract_strided_slice %222 {offsets = [0, 256], sizes = [10, 128], strides = [1, 1]} : vector<10x512xf32> to vector<10x128xf32>
    %226 = vector.extract_strided_slice %222 {offsets = [0, 384], sizes = [10, 128], strides = [1, 1]} : vector<10x512xf32> to vector<10x128xf32>
    %cst_129 = arith.constant 5.000000e-01 : f32
    %227 = vector.broadcast %cst_129 : f32 to vector<10x128xf32>
    %228 = arith.mulf %227, %223 : vector<10x128xf32>
    %229 = math.tanh %228 : vector<10x128xf32>
    %cst_130 = arith.constant 5.000000e-01 : f32
    %230 = vector.broadcast %cst_130 : f32 to vector<10x128xf32>
    %231 = arith.mulf %230, %229 : vector<10x128xf32>
    %cst_131 = arith.constant 5.000000e-01 : f32
    %232 = vector.broadcast %cst_131 : f32 to vector<10x128xf32>
    %233 = arith.addf %231, %232 : vector<10x128xf32>
    %234 = arith.mulf %233, %233 : vector<10x128xf32>
    %235 = arith.subf %233, %234 : vector<10x128xf32>
    %236 = arith.mulf %233, %235 : vector<10x128xf32>
    %cst_132 = arith.constant 2.000000e+00 : f32
    %237 = vector.broadcast %cst_132 : f32 to vector<10x128xf32>
    %238 = arith.mulf %237, %236 : vector<10x128xf32>
    %239 = arith.subf %235, %238 : vector<10x128xf32>
    %c0_133 = arith.constant 0 : index
    %c0_134 = arith.constant 0 : index
    %240 = vector.load %arg7[%c0_133, %c0_134] : memref<11x512xf32, #tpu.memory_space<vmem>>, vector<10x128xf32>
    tpu.vector_store %arg7[%c0_133, %c0_134], %233 {strides = array<i32>} : memref<11x512xf32, #tpu.memory_space<vmem>>, vector<10x128xf32>,
    %241 = arith.mulf %235, %224 : vector<10x128xf32>
    %c0_135 = arith.constant 0 : index
    %c128_136 = arith.constant 128 : index
    %242 = vector.load %arg7[%c0_135, %c128_136] : memref<11x512xf32, #tpu.memory_space<vmem>>, vector<10x128xf32>
    tpu.vector_store %arg7[%c0_135, %c128_136], %241 {strides = array<i32>} : memref<11x512xf32, #tpu.memory_space<vmem>>, vector<10x128xf32>,
    %243 = arith.mulf %235, %225 : vector<10x128xf32>
    %c0_137 = arith.constant 0 : index
    %c256_138 = arith.constant 256 : index
    %244 = vector.load %arg7[%c0_137, %c256_138] : memref<11x512xf32, #tpu.memory_space<vmem>>, vector<10x128xf32>
    tpu.vector_store %arg7[%c0_137, %c256_138], %243 {strides = array<i32>} : memref<11x512xf32, #tpu.memory_space<vmem>>, vector<10x128xf32>,
    %245 = arith.mulf %225, %225 : vector<10x128xf32>
    %246 = arith.mulf %239, %245 : vector<10x128xf32>
    %247 = arith.mulf %235, %226 : vector<10x128xf32>
    %248 = arith.addf %246, %247 : vector<10x128xf32>
    %c0_139 = arith.constant 0 : index
    %c384_140 = arith.constant 384 : index
    %249 = vector.load %arg7[%c0_139, %c384_140] : memref<11x512xf32, #tpu.memory_space<vmem>>, vector<10x128xf32>
    tpu.vector_store %arg7[%c0_139, %c384_140], %248 {strides = array<i32>} : memref<11x512xf32, #tpu.memory_space<vmem>>, vector<10x128xf32>,
    %c0_141 = arith.constant 0 : index
    %c0_142 = arith.constant 0 : index
    %250 = vector.load %arg4[%c0_141, %c0_142] : memref<1x11xf32, #tpu.memory_space<vmem>>, vector<1x11xf32>
    %c0_143 = arith.constant 0 : index
    %c0_144 = arith.constant 0 : index
    %251 = vector.load %arg7[%c0_143, %c0_144] : memref<11x512xf32, #tpu.memory_space<vmem>>, vector<11x512xf32>
    %cst_145 = arith.constant dense<0.000000e+00> : vector<1x512xf32>
    %252 = tpu.matmul %250, %251, %cst_145 {dimension_numbers = #tpu.dot_dimension_numbers<[1], [0], [0], [1], [0, 0, 1, 1], [], []>} : vector<1x11xf32>, vector<11x512xf32>, vector<1x512xf32> -> vector<1x512xf32>
    %253 = vector.extract_strided_slice %252 {offsets = [0, 0], sizes = [1, 128], strides = [1, 1]} : vector<1x512xf32> to vector<1x128xf32>
    %254 = vector.extract_strided_slice %252 {offsets = [0, 128], sizes = [1, 128], strides = [1, 1]} : vector<1x512xf32> to vector<1x128xf32>
    %255 = vector.extract_strided_slice %252 {offsets = [0, 256], sizes = [1, 128], strides = [1, 1]} : vector<1x512xf32> to vector<1x128xf32>
    %256 = vector.extract_strided_slice %252 {offsets = [0, 384], sizes = [1, 128], strides = [1, 1]} : vector<1x512xf32> to vector<1x128xf32>
    %c0_146 = arith.constant 0 : index
    %c0_147 = arith.constant 0 : index
    %257 = vector.load %arg5[%c0_146, %c0_147] : memref<1x128xf32, #tpu.memory_space<vmem>>, vector<1x128xf32>
    tpu.vector_store %arg5[%c0_146, %c0_147], %253 {strides = array<i32>} : memref<1x128xf32, #tpu.memory_space<vmem>>, vector<1x128xf32>,
    %258 = arith.mulf %253, %255 : vector<1x128xf32>
    %259 = arith.addf %254, %258 : vector<1x128xf32>
    %cst_148 = arith.constant 0.00318309898 : f32
    %260 = vector.broadcast %cst_148 : f32 to vector<1x128xf32>
    %261 = arith.mulf %260, %256 : vector<1x128xf32>
    %262 = arith.subf %259, %261 : vector<1x128xf32>
    %c0_149 = arith.constant 0 : index
    %c0_150 = arith.constant 0 : index
    %263 = vector.load %arg6[%c0_149, %c0_150] : memref<1x128xf32, #tpu.memory_space<vmem>>, vector<1x128xf32>
    tpu.vector_store %arg6[%c0_149, %c0_150], %262 {strides = array<i32>} : memref<1x128xf32, #tpu.memory_space<vmem>>, vector<1x128xf32>,
    return
  }
  func.func @transform_0(%arg0: i32) -> (i32, i32) {
    %c0_i32 = arith.constant 0 : i32
    %c0_i32_0 = arith.constant 0 : i32
    return %c0_i32, %arg0 : i32, i32
  }
  func.func @transform_1(%arg0: i32) -> (i32, i32) {
    %c0_i32 = arith.constant 0 : i32
    %c0_i32_0 = arith.constant 0 : i32
    %c0_i32_1 = arith.constant 0 : i32
    return %c0_i32, %c0_i32_0 : i32, i32
  }
  func.func @transform_2(%arg0: i32) -> (i32, i32, i32) {
    %c0_i32 = arith.constant 0 : i32
    %c0_i32_0 = arith.constant 0 : i32
    %c0_i32_1 = arith.constant 0 : i32
    %c0_i32_2 = arith.constant 0 : i32
    return %c0_i32, %c0_i32_0, %c0_i32_1 : i32, i32, i32
  }
  func.func @transform_3(%arg0: i32) -> (i32, i32) {
    %c0_i32 = arith.constant 0 : i32
    %c0_i32_0 = arith.constant 0 : i32
    %c0_i32_1 = arith.constant 0 : i32
    return %c0_i32, %c0_i32_0 : i32, i32
  }
  func.func @transform_4(%arg0: i32) -> (i32, i32) {
    %c0_i32 = arith.constant 0 : i32
    %c0_i32_0 = arith.constant 0 : i32
    return %c0_i32, %arg0 : i32, i32
  }
  func.func @transform_5(%arg0: i32) -> (i32, i32) {
    %c0_i32 = arith.constant 0 : i32
    %c0_i32_0 = arith.constant 0 : i32
    return %c0_i32, %arg0 : i32, i32
  }
}

</mosaic_0001>

<llo_original>
// kernel: tpu_custom_call.1
$region0: #{tpu_custom_call.1}
  #allocation0 [shape = 'u32[]', space=smem, size = 0x4, offset = 0x4, fixed_abs, tag = 'smem constant byte address 0x4 - core index']
  #allocation1 [shape = 'u32[144,128]{1,0:T(1,128)}', space=vmem, size = 0x12000, scoped, tag = 'internal scratch']
  #allocation2 [shape = 'f32[11,512]{1,0:T(8,128)}', space=vmem, size = 0x8000, scoped, tag = 'scratch operand']
  %s0 = inlined_call_operand.vmem [shape: f32[3,128], index: 0, kind: input, shape index: {}]
  %s1 = inlined_call_operand.vmem [shape: f32[10,3], index: 1, kind: input, shape index: {}]
  %s2 = inlined_call_operand.vmem [shape: f32[7,10,11], index: 2, kind: input, shape index: {}]
  %s3 = inlined_call_operand.vmem [shape: f32[1,11], index: 3, kind: input, shape index: {}]
  %s4 = inlined_call_operand.hbm [shape: f32[1,128], index: 4, kind: output, shape index: {0}]
  %s5 = inlined_call_operand.hbm [shape: f32[1,128], index: 5, kind: output, shape index: {1}]
  %6 = xla_tuple %s4, %s5
  %s7 = sld [smem:[#allocation0]]
  $region34: #{tpu_custom_call.1} parent=0
    _
  %s9 = ssub.s32 1, %s7
  %s10 = scalar_select 0, %s9, %s7
  $region1: #{tpu_custom_call.1} parent=0
    #allocation3 [shape = 'u8[512]{0}', space=vmem, size = 0x400, scoped, tag = 'output window, operand 0, single buffered']
    #allocation4 [shape = 's32[1]{0}', space=sflag, size = 0x4, scoped, tag = 'scoped memory for tpu_custom_call.1']
    #allocation5 [shape = 'u8[512]{0}', space=vmem, size = 0x400, scoped, tag = 'output window, operand 1, single buffered']
    #allocation6 [shape = 's32[1]{0}', space=sflag, size = 0x4, scoped, tag = 'scoped memory for tpu_custom_call.1']
    %11 = vsyncpa [#allocation4], 0
    %12 = vsyncpa [#allocation6], 0
    // Predicated region
    $region2: #{tpu_custom_call.1} parent=1 // pred_check
      _
    $region3: #{tpu_custom_call.1} parent=1 // pred_check_branch
      %14 = sbr.rel (0) target = $region5
    $region4: #{tpu_custom_call.1} parent=1 // pred_region
      _
    $region5: #{tpu_custom_call.1} parent=1 // pred_fallthru
      _
    // Predicated region
    $region6: #{tpu_custom_call.1} parent=1 // pred_check
      _
    $region7: #{tpu_custom_call.1} parent=1 // pred_check_branch
      %16 = sbr.rel (0) target = $region9
    $region8: #{tpu_custom_call.1} parent=1 // pred_region
      _
    $region9: #{tpu_custom_call.1} parent=1 // pred_fallthru
      _
    // Predicated region
    $region10: #{tpu_custom_call.1} parent=1 // pred_check
      _
    $region11: #{tpu_custom_call.1} parent=1 // pred_check_branch
      %18 = sbr.rel (0) target = $region13
    $region12: #{tpu_custom_call.1} parent=1 // pred_region
      _
    $region13: #{tpu_custom_call.1} parent=1 // pred_fallthru
      _
    // Predicated region
    $region14: #{tpu_custom_call.1} parent=1 // pred_check
      _
    $region15: #{tpu_custom_call.1} parent=1 // pred_check_branch
      %20 = sbr.rel (0) target = $region17
    $region16: #{tpu_custom_call.1} parent=1 // pred_region
      _
    $region17: #{tpu_custom_call.1} parent=1 // pred_fallthru
      _
    %21 = vst [vmem:[#allocation2 + $0x22] sm:$0x1] 1.0
    %v22 = vlaneseq
    %vm23 = vcmp.ge.s32.totalorder %v22, 0
    %vm24 = vcmp.lt.s32.totalorder %v22, 384
    %vm25 = vmand %vm23, %vm24
    %s26 = scalar_lea.vmem [#allocation2], 42
    %27 = vst.msk [vmem:[%s26] ss:$8 sm:$0x7] %vm25, 0.0
    %28 = vst.msk [vmem:[%s26] ss:$8 sm:$0x0] %vm25, 0.0
    %v29 = vld [vmem:[%s1] sm:$0xff]
    %v30 = vld [vmem:[%s1 + $0x8] sm:$0x3]
    %v31 = vld [vmem:[%s0] sm:$0x7]
    %vm32 = vcmask 23552
    %v34 = vsel %vm32, %v29, 0
    %v37 = vsel %vm32, %v30, 0
    %vm39 = vcmask 1042432
    %v41 = vsel %vm39, %v31, 0
    %43 = vmatprep.subr.mxu0 0.0
    %44 = vmatpush1.msra.mxu0 %v41
    %45 = vmatprep.subr.mxu0 0.0
    %46 = vmatpush1.msra.mxu0 0.0
    %47 = vmatprep.subr.mxu0 0.0
    %48 = vmatpush1.msra.mxu0 0.0
    %49 = vmatprep.subr.mxu0 0.0
    %50 = vmatpush1.msra.mxu0 0.0
    %51 = vmatprep.subr.mxu0 0.0
    %52 = vmatpush1.msra.mxu0 0.0
    %53 = vmatprep.subr.mxu0 0.0
    %54 = vmatpush1.msra.mxu0 0.0
    %55 = vmatprep.subr.mxu0 0.0
    %56 = vmatpush1.msra.mxu0 0.0
    %57 = vmatprep.subr.mxu0 0.0
    %58 = vmatpush1.msra.mxu0 0.0
    %59 = vmatprep.subr.mxu0 0.0
    %60 = vmatpush1.msra.mxu0 0.0
    %61 = vmatprep.subr.mxu0 0.0
    %62 = vmatpush1.msra.mxu0 0.0
    %63 = vmatprep.subr.mxu0 0.0
    %64 = vmatpush1.msra.mxu0 0.0
    %65 = vmatprep.subr.mxu0 0.0
    %66 = vmatpush1.msra.mxu0 0.0
    %67 = vmatprep.subr.mxu0 0.0
    %68 = vmatpush1.msra.mxu0 0.0
    %69 = vmatprep.subr.mxu0 0.0
    %70 = vmatpush1.msra.mxu0 0.0
    %71 = vmatprep.subr.mxu0 0.0
    %72 = vmatpush1.msra.mxu0 0.0
    %73 = vmatprep.subr.mxu0 0.0
    %74 = vmatpush1.msra.mxu0 0.0
    %75 = vmatprep.subr.mxu0 0.0
    %76 = vmatpush1.msra.mxu0 0.0
    %77 = vmatprep.subr.mxu0 0.0
    %78 = vmatpush1.msra.mxu0 0.0
    %79 = vmatprep.subr.mxu0 0.0
    %80 = vmatpush1.msra.mxu0 0.0
    %81 = vmatprep.subr.mxu0 0.0
    %82 = vmatpush1.msra.mxu0 0.0
    %83 = vmatprep.subr.mxu0 0.0
    %84 = vmatpush1.msra.mxu0 0.0
    %85 = vmatprep.subr.mxu0 0.0
    %86 = vmatpush1.msra.mxu0 0.0
    %87 = vmatprep.subr.mxu0 0.0
    %88 = vmatpush1.msra.mxu0 0.0
    %89 = vmatprep.subr.mxu0 0.0
    %90 = vmatpush1.msra.mxu0 0.0
    %91 = vmatprep.subr.mxu0 0.0
    %92 = vmatpush1.msra.mxu0 0.0
    %93 = vmatprep.subr.mxu0 0.0
    %94 = vmatpush1.msra.mxu0 0.0
    %95 = vmatprep.subr.mxu0 0.0
    %96 = vmatpush1.msra.mxu0 0.0
    %97 = vmatprep.subr.mxu0 0.0
    %98 = vmatpush1.msra.mxu0 0.0
    %99 = vmatprep.subr.mxu0 0.0
    %100 = vmatpush1.msra.mxu0 0.0
    %101 = vmatprep.subr.mxu0 0.0
    %102 = vmatpush1.msra.mxu0 0.0
    %103 = vmatprep.subr.mxu0 0.0
    %104 = vmatpush1.msra.mxu0 0.0
    %105 = vmatprep.subr.mxu0 0.0
    %106 = vmatpush1.msra.mxu0 0.0
    %107 = vmatprep.mubr.f32.mxu0 0.0
    %108 = vmatmul.mubr.f32.gmra.mrb[0].mxu0 %v34
    %v109 = vpop.f32.mrb[0].mxu0
    %v110 = vadd.f32 0.0, %v109
    %v111 = vpop.f32.mrb[0].mxu0
    %112 = vmatprep.mubr.f32.mxu0 0.0
    %113 = vmatmul.mubr.f32.gmra.mrb[0].mxu0 %v37
    %v114 = vpop.f32.mrb[0].mxu0
    %v115 = vadd.f32 0.0, %v114
    %v116 = vpop.f32.mrb[0].mxu0
    %117 = vdwg.mxu0
    %v118 = vmul.f32 %v110, 0.5
    %v119 = vmul.f32 %v115, 0.5
    %v120 = vtanh.pop %v118
    %v121 = vtanh.pop %v119
    %v122 = vmul.f32 %v120, 0.5
    %v123 = vmul.f32 %v121, 0.5
    %v124 = vadd.f32 %v122, 0.5
    %v125 = vadd.f32 %v123, 0.5
    %v126 = vmul.f32 %v124, %v124
    %v127 = vmul.f32 %v125, %v125
    %v128 = vsub.f32 %v124, %v126
    %v129 = vsub.f32 %v125, %v127
    %v130 = vmul.f32 %v124, %v128
    %v131 = vmul.f32 %v125, %v129
    %v132 = vmul.f32 %v130, 2.0
    %v133 = vmul.f32 %v131, 2.0
    %v134 = vsub.f32 %v128, %v132
    %v135 = vsub.f32 %v129, %v133
    %136 = vst [vmem:[#allocation2] sm:$0xff] %v124
    %137 = vst [vmem:[#allocation2 + $0x20] sm:$0x3] %v125
    %138 = vset.pattern.permute.xlu0 0
    %139 = vperm.xlu0 %138, %v29
    %v140 = vpop.permute.xlu0 %139
    %142 = vset.pattern.permute.xlu0 0
    %143 = vperm.xlu0 %142, %v30
    %v144 = vpop.permute.xlu0 %143
    %v146 = vmul.f32 %v128, %v140
    %v147 = vmul.f32 %v129, %v144
    %148 = vst [vmem:[#allocation2 + $0x8] sm:$0xff] %v146
    %149 = vst [vmem:[#allocation2 + $0x28] sm:$0x3] %v147
    %150 = vset.pattern.permute.xlu0 1
    %151 = vperm.xlu0 %150, %v29
    %v152 = vpop.permute.xlu0 %151
    %154 = vset.pattern.permute.xlu0 1
    %155 = vperm.xlu0 %154, %v30
    %v156 = vpop.permute.xlu0 %155
    %v158 = vmul.f32 %v128, %v152
    %v159 = vmul.f32 %v129, %v156
    %160 = vst [vmem:[#allocation2 + $0x10] sm:$0xff] %v158
    %161 = vst [vmem:[#allocation2 + $0x30] sm:$0x3] %v159
    %v162 = vmul.f32 %v29, %v29
    %v163 = vmul.f32 %v30, %v30
    %165 = vset.pattern.permute.xlu0 1
    %166 = vperm.xlu0 %165, %v162
    %v167 = vpop.permute.xlu0 %166
    %170 = vset.pattern.permute.xlu0 1
    %171 = vperm.xlu0 %170, %v163
    %v172 = vpop.permute.xlu0 %171
    %v174 = vmul.f32 %v134, %v167
    %v175 = vmul.f32 %v135, %v172
    %176 = vst [vmem:[#allocation2 + $0x18] sm:$0xff] %v174
    %177 = vst [vmem:[#allocation2 + $0x38] sm:$0x3] %v175
    %v178 = vld [vmem:[%s2] sm:$0xff]
    %v179 = vld [vmem:[%s2 + $0x8] sm:$0x3]
    %v180 = vld [vmem:[#allocation2] sm:$0xff]
    %v181 = vld [vmem:[#allocation2 + $0x8] sm:$0xff]
    %v182 = vld [vmem:[#allocation2 + $0x10] sm:$0xff]
    %v183 = vld [vmem:[#allocation2 + $0x18] sm:$0xff]
    %v184 = vld [vmem:[#allocation2 + $0x20] sm:$0x7]
    %v185 = vld [vmem:[#allocation2 + $0x28] sm:$0x7]
    %v186 = vld [vmem:[#allocation2 + $0x30] sm:$0x7]
    %v187 = vld [vmem:[#allocation2 + $0x38] sm:$0x7]
    %vm188 = vcmask 89088
    %v190 = vsel %vm188, %v178, 0
    %v193 = vsel %vm188, %v179, 0
    %v196 = vsel %vm39, %v184, 0
    %v199 = vsel %vm39, %v185, 0
    %v202 = vsel %vm39, %v186, 0
    %v205 = vsel %vm39, %v187, 0
    %207 = vmatprep.subr.mxu0 %v181
    %208 = vmatpush1.msra.mxu0 %v180
    %209 = vmatprep.subr.mxu0 %v199
    %210 = vmatpush1.msra.mxu0 %v196
    %211 = vmatprep.subr.mxu0 0.0
    %212 = vmatpush1.msra.mxu0 0.0
    %213 = vmatprep.subr.mxu0 0.0
    %214 = vmatpush1.msra.mxu0 0.0
    %215 = vmatprep.subr.mxu0 0.0
    %216 = vmatpush1.msra.mxu0 0.0
    %217 = vmatprep.subr.mxu0 0.0
    %218 = vmatpush1.msra.mxu0 0.0
    %219 = vmatprep.subr.mxu0 0.0
    %220 = vmatpush1.msra.mxu0 0.0
    %221 = vmatprep.subr.mxu0 0.0
    %222 = vmatpush1.msra.mxu0 0.0
    %223 = vmatprep.subr.mxu0 0.0
    %224 = vmatpush1.msra.mxu0 0.0
    %225 = vmatprep.subr.mxu0 0.0
    %226 = vmatpush1.msra.mxu0 0.0
    %227 = vmatprep.subr.mxu0 0.0
    %228 = vmatpush1.msra.mxu0 0.0
    %229 = vmatprep.subr.mxu0 0.0
    %230 = vmatpush1.msra.mxu0 0.0
    %231 = vmatprep.subr.mxu0 0.0
    %232 = vmatpush1.msra.mxu0 0.0
    %233 = vmatprep.subr.mxu0 0.0
    %234 = vmatpush1.msra.mxu0 0.0
    %235 = vmatprep.subr.mxu0 0.0
    %236 = vmatpush1.msra.mxu0 0.0
    %237 = vmatprep.subr.mxu0 0.0
    %238 = vmatpush1.msra.mxu0 0.0
    %239 = vmatprep.subr.mxu0 0.0
    %240 = vmatpush1.msra.mxu0 0.0
    %241 = vmatprep.subr.mxu0 0.0
    %242 = vmatpush1.msra.mxu0 0.0
    %243 = vmatprep.subr.mxu0 0.0
    %244 = vmatpush1.msra.mxu0 0.0
    %245 = vmatprep.subr.mxu0 0.0
    %246 = vmatpush1.msra.mxu0 0.0
    %247 = vmatprep.subr.mxu0 0.0
    %248 = vmatpush1.msra.mxu0 0.0
    %249 = vmatprep.subr.mxu0 0.0
    %250 = vmatpush1.msra.mxu0 0.0
    %251 = vmatprep.subr.mxu0 0.0
    %252 = vmatpush1.msra.mxu0 0.0
    %253 = vmatprep.subr.mxu0 0.0
    %254 = vmatpush1.msra.mxu0 0.0
    %255 = vmatprep.subr.mxu0 0.0
    %256 = vmatpush1.msra.mxu0 0.0
    %257 = vmatprep.subr.mxu0 0.0
    %258 = vmatpush1.msra.mxu0 0.0
    %259 = vmatprep.subr.mxu0 0.0
    %260 = vmatpush1.msra.mxu0 0.0
    %261 = vmatprep.subr.mxu0 0.0
    %262 = vmatpush1.msra.mxu0 0.0
    %263 = vmatprep.subr.mxu0 0.0
    %264 = vmatpush1.msra.mxu0 0.0
    %265 = vmatprep.subr.mxu0 0.0
    %266 = vmatpush1.msra.mxu0 0.0
    %267 = vmatprep.subr.mxu0 0.0
    %268 = vmatpush1.msra.mxu0 0.0
    %269 = vmatprep.subr.mxu0 0.0
    %270 = vmatpush1.msra.mxu0 0.0
    %271 = vmatprep.mubr.f32.mxu0 0.0
    %272 = vmatmul.mubr.f32.gmra.mrb[0].mxu0 %v190
    %v273 = vpop.f32.mrb[0].mxu0
    %v274 = vadd.f32 0.0, %v273
    %v275 = vpop.f32.mrb[0].mxu0
    %v276 = vadd.f32 0.0, %v275
    %277 = vmatprep.mubr.f32.mxu0 0.0
    %278 = vmatmul.mubr.f32.gmra.mrb[0].mxu0 %v193
    %v279 = vpop.f32.mrb[0].mxu0
    %v280 = vadd.f32 0.0, %v279
    %v281 = vpop.f32.mrb[0].mxu0
    %v282 = vadd.f32 0.0, %v281
    %283 = vdwg.mxu0
    %284 = vmatprep.subr.mxu0 %v183
    %285 = vmatpush1.msra.mxu0 %v182
    %286 = vmatprep.subr.mxu0 %v205
    %287 = vmatpush1.msra.mxu0 %v202
    %288 = vmatprep.subr.mxu0 0.0
    %289 = vmatpush1.msra.mxu0 0.0
    %290 = vmatprep.subr.mxu0 0.0
    %291 = vmatpush1.msra.mxu0 0.0
    %292 = vmatprep.subr.mxu0 0.0
    %293 = vmatpush1.msra.mxu0 0.0
    %294 = vmatprep.subr.mxu0 0.0
    %295 = vmatpush1.msra.mxu0 0.0
    %296 = vmatprep.subr.mxu0 0.0
    %297 = vmatpush1.msra.mxu0 0.0
    %298 = vmatprep.subr.mxu0 0.0
    %299 = vmatpush1.msra.mxu0 0.0
    %300 = vmatprep.subr.mxu0 0.0
    %301 = vmatpush1.msra.mxu0 0.0
    %302 = vmatprep.subr.mxu0 0.0
    %303 = vmatpush1.msra.mxu0 0.0
    %304 = vmatprep.subr.mxu0 0.0
    %305 = vmatpush1.msra.mxu0 0.0
    %306 = vmatprep.subr.mxu0 0.0
    %307 = vmatpush1.msra.mxu0 0.0
    %308 = vmatprep.subr.mxu0 0.0
    %309 = vmatpush1.msra.mxu0 0.0
    %310 = vmatprep.subr.mxu0 0.0
    %311 = vmatpush1.msra.mxu0 0.0
    %312 = vmatprep.subr.mxu0 0.0
    %313 = vmatpush1.msra.mxu0 0.0
    %314 = vmatprep.subr.mxu0 0.0
    %315 = vmatpush1.msra.mxu0 0.0
    %316 = vmatprep.subr.mxu0 0.0
    %317 = vmatpush1.msra.mxu0 0.0
    %318 = vmatprep.subr.mxu0 0.0
    %319 = vmatpush1.msra.mxu0 0.0
    %320 = vmatprep.subr.mxu0 0.0
    %321 = vmatpush1.msra.mxu0 0.0
    %322 = vmatprep.subr.mxu0 0.0
    %323 = vmatpush1.msra.mxu0 0.0
    %324 = vmatprep.subr.mxu0 0.0
    %325 = vmatpush1.msra.mxu0 0.0
    %326 = vmatprep.subr.mxu0 0.0
    %327 = vmatpush1.msra.mxu0 0.0
    %328 = vmatprep.subr.mxu0 0.0
    %329 = vmatpush1.msra.mxu0 0.0
    %330 = vmatprep.subr.mxu0 0.0
    %331 = vmatpush1.msra.mxu0 0.0
    %332 = vmatprep.subr.mxu0 0.0
    %333 = vmatpush1.msra.mxu0 0.0
    %334 = vmatprep.subr.mxu0 0.0
    %335 = vmatpush1.msra.mxu0 0.0
    %336 = vmatprep.subr.mxu0 0.0
    %337 = vmatpush1.msra.mxu0 0.0
    %338 = vmatprep.subr.mxu0 0.0
    %339 = vmatpush1.msra.mxu0 0.0
    %340 = vmatprep.subr.mxu0 0.0
    %341 = vmatpush1.msra.mxu0 0.0
    %342 = vmatprep.subr.mxu0 0.0
    %343 = vmatpush1.msra.mxu0 0.0
    %344 = vmatprep.subr.mxu0 0.0
    %345 = vmatpush1.msra.mxu0 0.0
    %346 = vmatprep.subr.mxu0 0.0
    %347 = vmatpush1.msra.mxu0 0.0
    %348 = vmatprep.mubr.f32.mxu0 0.0
    %349 = vmatmul.mubr.f32.gmra.mrb[0].mxu0 %v190
    %v350 = vpop.f32.mrb[0].mxu0
    %v351 = vadd.f32 0.0, %v350
    %v352 = vpop.f32.mrb[0].mxu0
    %v353 = vadd.f32 0.0, %v352
    %354 = vmatprep.mubr.f32.mxu0 0.0
    %355 = vmatmul.mubr.f32.gmra.mrb[0].mxu0 %v193
    %v356 = vpop.f32.mrb[0].mxu0
    %v357 = vadd.f32 0.0, %v356
    %v358 = vpop.f32.mrb[0].mxu0
    %v359 = vadd.f32 0.0, %v358
    %360 = vdwg.mxu0
    %v361 = vmul.f32 %v274, 0.5
    %v362 = vmul.f32 %v280, 0.5
    %v363 = vtanh.pop %v361
    %v364 = vtanh.pop %v362
    %v365 = vmul.f32 %v363, 0.5
    %v366 = vmul.f32 %v364, 0.5
    %v367 = vadd.f32 %v365, 0.5
    %v368 = vadd.f32 %v366, 0.5
    %v369 = vmul.f32 %v367, %v367
    %v370 = vmul.f32 %v368, %v368
    %v371 = vsub.f32 %v367, %v369
    %v372 = vsub.f32 %v368, %v370
    %v373 = vmul.f32 %v367, %v371
    %v374 = vmul.f32 %v368, %v372
    %v375 = vmul.f32 %v373, 2.0
    %v376 = vmul.f32 %v374, 2.0
    %v377 = vsub.f32 %v371, %v375
    %v378 = vsub.f32 %v372, %v376
    %379 = vst [vmem:[#allocation2] sm:$0xff] %v367
    %380 = vst [vmem:[#allocation2 + $0x20] sm:$0x3] %v368
    %v381 = vmul.f32 %v371, %v276
    %v382 = vmul.f32 %v372, %v282
    %383 = vst [vmem:[#allocation2 + $0x8] sm:$0xff] %v381
    %384 = vst [vmem:[#allocation2 + $0x28] sm:$0x3] %v382
    %v385 = vmul.f32 %v371, %v351
    %v386 = vmul.f32 %v372, %v357
    %387 = vst [vmem:[#allocation2 + $0x10] sm:$0xff] %v385
    %388 = vst [vmem:[#allocation2 + $0x30] sm:$0x3] %v386
    %v389 = vmul.f32 %v351, %v351
    %v390 = vmul.f32 %v357, %v357
    %v391 = vmul.f32 %v377, %v389
    %v392 = vmul.f32 %v378, %v390
    %v393 = vmul.f32 %v371, %v353
    %v394 = vmul.f32 %v372, %v359
    %v395 = vadd.f32 %v391, %v393
    %v396 = vadd.f32 %v392, %v394
    %397 = vst [vmem:[#allocation2 + $0x18] sm:$0xff] %v395
    %398 = vst [vmem:[#allocation2 + $0x38] sm:$0x3] %v396
    %s399 = scalar_lea.vmem %s2, 16
    %v400 = vld [vmem:[%s399] sm:$0xff]
    %v401 = vld [vmem:[%s399 + $0x8] sm:$0x3]
    %v402 = vld [vmem:[#allocation2] sm:$0xff]
    %v403 = vld [vmem:[#allocation2 + $0x8] sm:$0xff]
    %v404 = vld [vmem:[#allocation2 + $0x10] sm:$0xff]
    %v405 = vld [vmem:[#allocation2 + $0x18] sm:$0xff]
    %v406 = vld [vmem:[#allocation2 + $0x20] sm:$0x7]
    %v407 = vld [vmem:[#allocation2 + $0x28] sm:$0x7]
    %v408 = vld [vmem:[#allocation2 + $0x30] sm:$0x7]
    %v409 = vld [vmem:[#allocation2 + $0x38] sm:$0x7]
    %v411 = vsel %vm188, %v400, 0
    %v414 = vsel %vm188, %v401, 0
    %v417 = vsel %vm39, %v406, 0
    %v420 = vsel %vm39, %v407, 0
    %v423 = vsel %vm39, %v408, 0
    %v426 = vsel %vm39, %v409, 0
    %428 = vmatprep.subr.mxu0 %v403
    %429 = vmatpush1.msra.mxu0 %v402
    %430 = vmatprep.subr.mxu0 %v420
    %431 = vmatpush1.msra.mxu0 %v417
    %432 = vmatprep.subr.mxu0 0.0
    %433 = vmatpush1.msra.mxu0 0.0
    %434 = vmatprep.subr.mxu0 0.0
    %435 = vmatpush1.msra.mxu0 0.0
    %436 = vmatprep.subr.mxu0 0.0
    %437 = vmatpush1.msra.mxu0 0.0
    %438 = vmatprep.subr.mxu0 0.0
    %439 = vmatpush1.msra.mxu0 0.0
    %440 = vmatprep.subr.mxu0 0.0
    %441 = vmatpush1.msra.mxu0 0.0
    %442 = vmatprep.subr.mxu0 0.0
    %443 = vmatpush1.msra.mxu0 0.0
    %444 = vmatprep.subr.mxu0 0.0
    %445 = vmatpush1.msra.mxu0 0.0
    %446 = vmatprep.subr.mxu0 0.0
    %447 = vmatpush1.msra.mxu0 0.0
    %448 = vmatprep.subr.mxu0 0.0
    %449 = vmatpush1.msra.mxu0 0.0
    %450 = vmatprep.subr.mxu0 0.0
    %451 = vmatpush1.msra.mxu0 0.0
    %452 = vmatprep.subr.mxu0 0.0
    %453 = vmatpush1.msra.mxu0 0.0
    %454 = vmatprep.subr.mxu0 0.0
    %455 = vmatpush1.msra.mxu0 0.0
    %456 = vmatprep.subr.mxu0 0.0
    %457 = vmatpush1.msra.mxu0 0.0
    %458 = vmatprep.subr.mxu0 0.0
    %459 = vmatpush1.msra.mxu0 0.0
    %460 = vmatprep.subr.mxu0 0.0
    %461 = vmatpush1.msra.mxu0 0.0
    %462 = vmatprep.subr.mxu0 0.0
    %463 = vmatpush1.msra.mxu0 0.0
    %464 = vmatprep.subr.mxu0 0.0
    %465 = vmatpush1.msra.mxu0 0.0
    %466 = vmatprep.subr.mxu0 0.0
    %467 = vmatpush1.msra.mxu0 0.0
    %468 = vmatprep.subr.mxu0 0.0
    %469 = vmatpush1.msra.mxu0 0.0
    %470 = vmatprep.subr.mxu0 0.0
    %471 = vmatpush1.msra.mxu0 0.0
    %472 = vmatprep.subr.mxu0 0.0
    %473 = vmatpush1.msra.mxu0 0.0
    %474 = vmatprep.subr.mxu0 0.0
    %475 = vmatpush1.msra.mxu0 0.0
    %476 = vmatprep.subr.mxu0 0.0
    %477 = vmatpush1.msra.mxu0 0.0
    %478 = vmatprep.subr.mxu0 0.0
    %479 = vmatpush1.msra.mxu0 0.0
    %480 = vmatprep.subr.mxu0 0.0
    %481 = vmatpush1.msra.mxu0 0.0
    %482 = vmatprep.subr.mxu0 0.0
    %483 = vmatpush1.msra.mxu0 0.0
    %484 = vmatprep.subr.mxu0 0.0
    %485 = vmatpush1.msra.mxu0 0.0
    %486 = vmatprep.subr.mxu0 0.0
    %487 = vmatpush1.msra.mxu0 0.0
    %488 = vmatprep.subr.mxu0 0.0
    %489 = vmatpush1.msra.mxu0 0.0
    %490 = vmatprep.subr.mxu0 0.0
    %491 = vmatpush1.msra.mxu0 0.0
    %492 = vmatprep.mubr.f32.mxu0 0.0
    %493 = vmatmul.mubr.f32.gmra.mrb[0].mxu0 %v411
    %v494 = vpop.f32.mrb[0].mxu0
    %v495 = vadd.f32 0.0, %v494
    %v496 = vpop.f32.mrb[0].mxu0
    %v497 = vadd.f32 0.0, %v496
    %498 = vmatprep.mubr.f32.mxu0 0.0
    %499 = vmatmul.mubr.f32.gmra.mrb[0].mxu0 %v414
    %v500 = vpop.f32.mrb[0].mxu0
    %v501 = vadd.f32 0.0, %v500
    %v502 = vpop.f32.mrb[0].mxu0
    %v503 = vadd.f32 0.0, %v502
    %504 = vdwg.mxu0
    %505 = vmatprep.subr.mxu0 %v405
    %506 = vmatpush1.msra.mxu0 %v404
    %507 = vmatprep.subr.mxu0 %v426
    %508 = vmatpush1.msra.mxu0 %v423
    %509 = vmatprep.subr.mxu0 0.0
    %510 = vmatpush1.msra.mxu0 0.0
    %511 = vmatprep.subr.mxu0 0.0
    %512 = vmatpush1.msra.mxu0 0.0
    %513 = vmatprep.subr.mxu0 0.0
    %514 = vmatpush1.msra.mxu0 0.0
    %515 = vmatprep.subr.mxu0 0.0
    %516 = vmatpush1.msra.mxu0 0.0
    %517 = vmatprep.subr.mxu0 0.0
    %518 = vmatpush1.msra.mxu0 0.0
    %519 = vmatprep.subr.mxu0 0.0
    %520 = vmatpush1.msra.mxu0 0.0
    %521 = vmatprep.subr.mxu0 0.0
    %522 = vmatpush1.msra.mxu0 0.0
    %523 = vmatprep.subr.mxu0 0.0
    %524 = vmatpush1.msra.mxu0 0.0
    %525 = vmatprep.subr.mxu0 0.0
    %526 = vmatpush1.msra.mxu0 0.0
    %527 = vmatprep.subr.mxu0 0.0
    %528 = vmatpush1.msra.mxu0 0.0
    %529 = vmatprep.subr.mxu0 0.0
    %530 = vmatpush1.msra.mxu0 0.0
    %531 = vmatprep.subr.mxu0 0.0
    %532 = vmatpush1.msra.mxu0 0.0
    %533 = vmatprep.subr.mxu0 0.0
    %534 = vmatpush1.msra.mxu0 0.0
    %535 = vmatprep.subr.mxu0 0.0
    %536 = vmatpush1.msra.mxu0 0.0
    %537 = vmatprep.subr.mxu0 0.0
    %538 = vmatpush1.msra.mxu0 0.0
    %539 = vmatprep.subr.mxu0 0.0
    %540 = vmatpush1.msra.mxu0 0.0
    %541 = vmatprep.subr.mxu0 0.0
    %542 = vmatpush1.msra.mxu0 0.0
    %543 = vmatprep.subr.mxu0 0.0
    %544 = vmatpush1.msra.mxu0 0.0
    %545 = vmatprep.subr.mxu0 0.0
    %546 = vmatpush1.msra.mxu0 0.0
    %547 = vmatprep.subr.mxu0 0.0
    %548 = vmatpush1.msra.mxu0 0.0
    %549 = vmatprep.subr.mxu0 0.0
    %550 = vmatpush1.msra.mxu0 0.0
    %551 = vmatprep.subr.mxu0 0.0
    %552 = vmatpush1.msra.mxu0 0.0
    %553 = vmatprep.subr.mxu0 0.0
    %554 = vmatpush1.msra.mxu0 0.0
    %555 = vmatprep.subr.mxu0 0.0
    %556 = vmatpush1.msra.mxu0 0.0
    %557 = vmatprep.subr.mxu0 0.0
    %558 = vmatpush1.msra.mxu0 0.0
    %559 = vmatprep.subr.mxu0 0.0
    %560 = vmatpush1.msra.mxu0 0.0
    %561 = vmatprep.subr.mxu0 0.0
    %562 = vmatpush1.msra.mxu0 0.0
    %563 = vmatprep.subr.mxu0 0.0
    %564 = vmatpush1.msra.mxu0 0.0
    %565 = vmatprep.subr.mxu0 0.0
    %566 = vmatpush1.msra.mxu0 0.0
    %567 = vmatprep.subr.mxu0 0.0
    %568 = vmatpush1.msra.mxu0 0.0
    %569 = vmatprep.mubr.f32.mxu0 0.0
    %570 = vmatmul.mubr.f32.gmra.mrb[0].mxu0 %v411
    %v571 = vpop.f32.mrb[0].mxu0
    %v572 = vadd.f32 0.0, %v571
    %v573 = vpop.f32.mrb[0].mxu0
    %v574 = vadd.f32 0.0, %v573
    %575 = vmatprep.mubr.f32.mxu0 0.0
    %576 = vmatmul.mubr.f32.gmra.mrb[0].mxu0 %v414
    %v577 = vpop.f32.mrb[0].mxu0
    %v578 = vadd.f32 0.0, %v577
    %v579 = vpop.f32.mrb[0].mxu0
    %v580 = vadd.f32 0.0, %v579
    %581 = vdwg.mxu0
    %v582 = vmul.f32 %v495, 0.5
    %v583 = vmul.f32 %v501, 0.5
    %v584 = vtanh.pop %v582
    %v585 = vtanh.pop %v583
    %v586 = vmul.f32 %v584, 0.5
    %v587 = vmul.f32 %v585, 0.5
    %v588 = vadd.f32 %v586, 0.5
    %v589 = vadd.f32 %v587, 0.5
    %v590 = vmul.f32 %v588, %v588
    %v591 = vmul.f32 %v589, %v589
    %v592 = vsub.f32 %v588, %v590
    %v593 = vsub.f32 %v589, %v591
    %v594 = vmul.f32 %v588, %v592
    %v595 = vmul.f32 %v589, %v593
    %v596 = vmul.f32 %v594, 2.0
    %v597 = vmul.f32 %v595, 2.0
    %v598 = vsub.f32 %v592, %v596
    %v599 = vsub.f32 %v593, %v597
    %600 = vst [vmem:[#allocation2] sm:$0xff] %v588
    %601 = vst [vmem:[#allocation2 + $0x20] sm:$0x3] %v589
    %v602 = vmul.f32 %v592, %v497
    %v603 = vmul.f32 %v593, %v503
    %604 = vst [vmem:[#allocation2 + $0x8] sm:$0xff] %v602
    %605 = vst [vmem:[#allocation2 + $0x28] sm:$0x3] %v603
    %v606 = vmul.f32 %v592, %v572
    %v607 = vmul.f32 %v593, %v578
    %608 = vst [vmem:[#allocation2 + $0x10] sm:$0xff] %v606
    %609 = vst [vmem:[#allocation2 + $0x30] sm:$0x3] %v607
    %v610 = vmul.f32 %v572, %v572
    %v611 = vmul.f32 %v578, %v578
    %v612 = vmul.f32 %v598, %v610
    %v613 = vmul.f32 %v599, %v611
    %v614 = vmul.f32 %v592, %v574
    %v615 = vmul.f32 %v593, %v580
    %v616 = vadd.f32 %v612, %v614
    %v617 = vadd.f32 %v613, %v615
    %618 = vst [vmem:[#allocation2 + $0x18] sm:$0xff] %v616
    %619 = vst [vmem:[#allocation2 + $0x38] sm:$0x3] %v617
    %s620 = scalar_lea.vmem %s2, 32
    %v621 = vld [vmem:[%s620] sm:$0xff]
    %v622 = vld [vmem:[%s620 + $0x8] sm:$0x3]
    %v623 = vld [vmem:[#allocation2] sm:$0xff]
    %v624 = vld [vmem:[#allocation2 + $0x8] sm:$0xff]
    %v625 = vld [vmem:[#allocation2 + $0x10] sm:$0xff]
    %v626 = vld [vmem:[#allocation2 + $0x18] sm:$0xff]
    %v627 = vld [vmem:[#allocation2 + $0x20] sm:$0x7]
    %v628 = vld [vmem:[#allocation2 + $0x28] sm:$0x7]
    %v629 = vld [vmem:[#allocation2 + $0x30] sm:$0x7]
    %v630 = vld [vmem:[#allocation2 + $0x38] sm:$0x7]
    %v632 = vsel %vm188, %v621, 0
    %v635 = vsel %vm188, %v622, 0
    %v638 = vsel %vm39, %v627, 0
    %v641 = vsel %vm39, %v628, 0
    %v644 = vsel %vm39, %v629, 0
    %v647 = vsel %vm39, %v630, 0
    %649 = vmatprep.subr.mxu0 %v624
    %650 = vmatpush1.msra.mxu0 %v623
    %651 = vmatprep.subr.mxu0 %v641
    %652 = vmatpush1.msra.mxu0 %v638
    %653 = vmatprep.subr.mxu0 0.0
    %654 = vmatpush1.msra.mxu0 0.0
    %655 = vmatprep.subr.mxu0 0.0
    %656 = vmatpush1.msra.mxu0 0.0
    %657 = vmatprep.subr.mxu0 0.0
    %658 = vmatpush1.msra.mxu0 0.0
    %659 = vmatprep.subr.mxu0 0.0
    %660 = vmatpush1.msra.mxu0 0.0
    %661 = vmatprep.subr.mxu0 0.0
    %662 = vmatpush1.msra.mxu0 0.0
    %663 = vmatprep.subr.mxu0 0.0
    %664 = vmatpush1.msra.mxu0 0.0
    %665 = vmatprep.subr.mxu0 0.0
    %666 = vmatpush1.msra.mxu0 0.0
    %667 = vmatprep.subr.mxu0 0.0
    %668 = vmatpush1.msra.mxu0 0.0
    %669 = vmatprep.subr.mxu0 0.0
    %670 = vmatpush1.msra.mxu0 0.0
    %671 = vmatprep.subr.mxu0 0.0
    %672 = vmatpush1.msra.mxu0 0.0
    %673 = vmatprep.subr.mxu0 0.0
    %674 = vmatpush1.msra.mxu0 0.0
    %675 = vmatprep.subr.mxu0 0.0
    %676 = vmatpush1.msra.mxu0 0.0
    %677 = vmatprep.subr.mxu0 0.0
    %678 = vmatpush1.msra.mxu0 0.0
    %679 = vmatprep.subr.mxu0 0.0
    %680 = vmatpush1.msra.mxu0 0.0
    %681 = vmatprep.subr.mxu0 0.0
    %682 = vmatpush1.msra.mxu0 0.0
    %683 = vmatprep.subr.mxu0 0.0
    %684 = vmatpush1.msra.mxu0 0.0
    %685 = vmatprep.subr.mxu0 0.0
    %686 = vmatpush1.msra.mxu0 0.0
    %687 = vmatprep.subr.mxu0 0.0
    %688 = vmatpush1.msra.mxu0 0.0
    %689 = vmatprep.subr.mxu0 0.0
    %690 = vmatpush1.msra.mxu0 0.0
    %691 = vmatprep.subr.mxu0 0.0
    %692 = vmatpush1.msra.mxu0 0.0
    %693 = vmatprep.subr.mxu0 0.0
    %694 = vmatpush1.msra.mxu0 0.0
    %695 = vmatprep.subr.mxu0 0.0
    %696 = vmatpush1.msra.mxu0 0.0
    %697 = vmatprep.subr.mxu0 0.0
    %698 = vmatpush1.msra.mxu0 0.0
    %699 = vmatprep.subr.mxu0 0.0
    %700 = vmatpush1.msra.mxu0 0.0
    %701 = vmatprep.subr.mxu0 0.0
    %702 = vmatpush1.msra.mxu0 0.0
    %703 = vmatprep.subr.mxu0 0.0
    %704 = vmatpush1.msra.mxu0 0.0
    %705 = vmatprep.subr.mxu0 0.0
    %706 = vmatpush1.msra.mxu0 0.0
    %707 = vmatprep.subr.mxu0 0.0
    %708 = vmatpush1.msra.mxu0 0.0
    %709 = vmatprep.subr.mxu0 0.0
    %710 = vmatpush1.msra.mxu0 0.0
    %711 = vmatprep.subr.mxu0 0.0
    %712 = vmatpush1.msra.mxu0 0.0
    %713 = vmatprep.mubr.f32.mxu0 0.0
    %714 = vmatmul.mubr.f32.gmra.mrb[0].mxu0 %v632
    %v715 = vpop.f32.mrb[0].mxu0
    %v716 = vadd.f32 0.0, %v715
    %v717 = vpop.f32.mrb[0].mxu0
    %v718 = vadd.f32 0.0, %v717
    %719 = vmatprep.mubr.f32.mxu0 0.0
    %720 = vmatmul.mubr.f32.gmra.mrb[0].mxu0 %v635
    %v721 = vpop.f32.mrb[0].mxu0
    %v722 = vadd.f32 0.0, %v721
    %v723 = vpop.f32.mrb[0].mxu0
    %v724 = vadd.f32 0.0, %v723
    %725 = vdwg.mxu0
    %726 = vmatprep.subr.mxu0 %v626
    %727 = vmatpush1.msra.mxu0 %v625
    %728 = vmatprep.subr.mxu0 %v647
    %729 = vmatpush1.msra.mxu0 %v644
    %730 = vmatprep.subr.mxu0 0.0
    %731 = vmatpush1.msra.mxu0 0.0
    %732 = vmatprep.subr.mxu0 0.0
    %733 = vmatpush1.msra.mxu0 0.0
    %734 = vmatprep.subr.mxu0 0.0
    %735 = vmatpush1.msra.mxu0 0.0
    %736 = vmatprep.subr.mxu0 0.0
    %737 = vmatpush1.msra.mxu0 0.0
    %738 = vmatprep.subr.mxu0 0.0
    %739 = vmatpush1.msra.mxu0 0.0
    %740 = vmatprep.subr.mxu0 0.0
    %741 = vmatpush1.msra.mxu0 0.0
    %742 = vmatprep.subr.mxu0 0.0
    %743 = vmatpush1.msra.mxu0 0.0
    %744 = vmatprep.subr.mxu0 0.0
    %745 = vmatpush1.msra.mxu0 0.0
    %746 = vmatprep.subr.mxu0 0.0
    %747 = vmatpush1.msra.mxu0 0.0
    %748 = vmatprep.subr.mxu0 0.0
    %749 = vmatpush1.msra.mxu0 0.0
    %750 = vmatprep.subr.mxu0 0.0
    %751 = vmatpush1.msra.mxu0 0.0
    %752 = vmatprep.subr.mxu0 0.0
    %753 = vmatpush1.msra.mxu0 0.0
    %754 = vmatprep.subr.mxu0 0.0
    %755 = vmatpush1.msra.mxu0 0.0
    %756 = vmatprep.subr.mxu0 0.0
    %757 = vmatpush1.msra.mxu0 0.0
    %758 = vmatprep.subr.mxu0 0.0
    %759 = vmatpush1.msra.mxu0 0.0
    %760 = vmatprep.subr.mxu0 0.0
    %761 = vmatpush1.msra.mxu0 0.0
    %762 = vmatprep.subr.mxu0 0.0
    %763 = vmatpush1.msra.mxu0 0.0
    %764 = vmatprep.subr.mxu0 0.0
    %765 = vmatpush1.msra.mxu0 0.0
    %766 = vmatprep.subr.mxu0 0.0
    %767 = vmatpush1.msra.mxu0 0.0
    %768 = vmatprep.subr.mxu0 0.0
    %769 = vmatpush1.msra.mxu0 0.0
    %770 = vmatprep.subr.mxu0 0.0
    %771 = vmatpush1.msra.mxu0 0.0
    %772 = vmatprep.subr.mxu0 0.0
    %773 = vmatpush1.msra.mxu0 0.0
    %774 = vmatprep.subr.mxu0 0.0
    %775 = vmatpush1.msra.mxu0 0.0
    %776 = vmatprep.subr.mxu0 0.0
    %777 = vmatpush1.msra.mxu0 0.0
    %778 = vmatprep.subr.mxu0 0.0
    %779 = vmatpush1.msra.mxu0 0.0
    %780 = vmatprep.subr.mxu0 0.0
    %781 = vmatpush1.msra.mxu0 0.0
    %782 = vmatprep.subr.mxu0 0.0
    %783 = vmatpush1.msra.mxu0 0.0
    %784 = vmatprep.subr.mxu0 0.0
    %785 = vmatpush1.msra.mxu0 0.0
    %786 = vmatprep.subr.mxu0 0.0
    %787 = vmatpush1.msra.mxu0 0.0
    %788 = vmatprep.subr.mxu0 0.0
    %789 = vmatpush1.msra.mxu0 0.0
    %790 = vmatprep.mubr.f32.mxu0 0.0
    %791 = vmatmul.mubr.f32.gmra.mrb[0].mxu0 %v632
    %v792 = vpop.f32.mrb[0].mxu0
    %v793 = vadd.f32 0.0, %v792
    %v794 = vpop.f32.mrb[0].mxu0
    %v795 = vadd.f32 0.0, %v794
    %796 = vmatprep.mubr.f32.mxu0 0.0
    %797 = vmatmul.mubr.f32.gmra.mrb[0].mxu0 %v635
    %v798 = vpop.f32.mrb[0].mxu0
    %v799 = vadd.f32 0.0, %v798
    %v800 = vpop.f32.mrb[0].mxu0
    %v801 = vadd.f32 0.0, %v800
    %802 = vdwg.mxu0
    %v803 = vmul.f32 %v716, 0.5
    %v804 = vmul.f32 %v722, 0.5
    %v805 = vtanh.pop %v803
    %v806 = vtanh.pop %v804
    %v807 = vmul.f32 %v805, 0.5
    %v808 = vmul.f32 %v806, 0.5
    %v809 = vadd.f32 %v807, 0.5
    %v810 = vadd.f32 %v808, 0.5
    %v811 = vmul.f32 %v809, %v809
    %v812 = vmul.f32 %v810, %v810
    %v813 = vsub.f32 %v809, %v811
    %v814 = vsub.f32 %v810, %v812
    %v815 = vmul.f32 %v809, %v813
    %v816 = vmul.f32 %v810, %v814
    %v817 = vmul.f32 %v815, 2.0
    %v818 = vmul.f32 %v816, 2.0
    %v819 = vsub.f32 %v813, %v817
    %v820 = vsub.f32 %v814, %v818
    %821 = vst [vmem:[#allocation2] sm:$0xff] %v809
    %822 = vst [vmem:[#allocation2 + $0x20] sm:$0x3] %v810
    %v823 = vmul.f32 %v813, %v718
    %v824 = vmul.f32 %v814, %v724
    %825 = vst [vmem:[#allocation2 + $0x8] sm:$0xff] %v823
    %826 = vst [vmem:[#allocation2 + $0x28] sm:$0x3] %v824
    %v827 = vmul.f32 %v813, %v793
    %v828 = vmul.f32 %v814, %v799
    %829 = vst [vmem:[#allocation2 + $0x10] sm:$0xff] %v827
    %830 = vst [vmem:[#allocation2 + $0x30] sm:$0x3] %v828
    %v831 = vmul.f32 %v793, %v793
    %v832 = vmul.f32 %v799, %v799
    %v833 = vmul.f32 %v819, %v831
    %v834 = vmul.f32 %v820, %v832
    %v835 = vmul.f32 %v813, %v795
    %v836 = vmul.f32 %v814, %v801
    %v837 = vadd.f32 %v833, %v835
    %v838 = vadd.f32 %v834, %v836
    %839 = vst [vmem:[#allocation2 + $0x18] sm:$0xff] %v837
    %840 = vst [vmem:[#allocation2 + $0x38] sm:$0x3] %v838
    %s841 = scalar_lea.vmem %s2, 48
    %v842 = vld [vmem:[%s841] sm:$0xff]
    %v843 = vld [vmem:[%s841 + $0x8] sm:$0x3]
    %v844 = vld [vmem:[#allocation2] sm:$0xff]
    %v845 = vld [vmem:[#allocation2 + $0x8] sm:$0xff]
    %v846 = vld [vmem:[#allocation2 + $0x10] sm:$0xff]
    %v847 = vld [vmem:[#allocation2 + $0x18] sm:$0xff]
    %v848 = vld [vmem:[#allocation2 + $0x20] sm:$0x7]
    %v849 = vld [vmem:[#allocation2 + $0x28] sm:$0x7]
    %v850 = vld [vmem:[#allocation2 + $0x30] sm:$0x7]
    %v851 = vld [vmem:[#allocation2 + $0x38] sm:$0x7]
    %v853 = vsel %vm188, %v842, 0
    %v856 = vsel %vm188, %v843, 0
    %v859 = vsel %vm39, %v848, 0
    %v862 = vsel %vm39, %v849, 0
    %v865 = vsel %vm39, %v850, 0
    %v868 = vsel %vm39, %v851, 0
    %870 = vmatprep.subr.mxu0 %v845
    %871 = vmatpush1.msra.mxu0 %v844
    %872 = vmatprep.subr.mxu0 %v862
    %873 = vmatpush1.msra.mxu0 %v859
    %874 = vmatprep.subr.mxu0 0.0
    %875 = vmatpush1.msra.mxu0 0.0
    %876 = vmatprep.subr.mxu0 0.0
    %877 = vmatpush1.msra.mxu0 0.0
    %878 = vmatprep.subr.mxu0 0.0
    %879 = vmatpush1.msra.mxu0 0.0
    %880 = vmatprep.subr.mxu0 0.0
    %881 = vmatpush1.msra.mxu0 0.0
    %882 = vmatprep.subr.mxu0 0.0
    %883 = vmatpush1.msra.mxu0 0.0
    %884 = vmatprep.subr.mxu0 0.0
    %885 = vmatpush1.msra.mxu0 0.0
    %886 = vmatprep.subr.mxu0 0.0
    %887 = vmatpush1.msra.mxu0 0.0
    %888 = vmatprep.subr.mxu0 0.0
    %889 = vmatpush1.msra.mxu0 0.0
    %890 = vmatprep.subr.mxu0 0.0
    %891 = vmatpush1.msra.mxu0 0.0
    %892 = vmatprep.subr.mxu0 0.0
    %893 = vmatpush1.msra.mxu0 0.0
    %894 = vmatprep.subr.mxu0 0.0
    %895 = vmatpush1.msra.mxu0 0.0
    %896 = vmatprep.subr.mxu0 0.0
    %897 = vmatpush1.msra.mxu0 0.0
    %898 = vmatprep.subr.mxu0 0.0
    %899 = vmatpush1.msra.mxu0 0.0
    %900 = vmatprep.subr.mxu0 0.0
    %901 = vmatpush1.msra.mxu0 0.0
    %902 = vmatprep.subr.mxu0 0.0
    %903 = vmatpush1.msra.mxu0 0.0
    %904 = vmatprep.subr.mxu0 0.0
    %905 = vmatpush1.msra.mxu0 0.0
    %906 = vmatprep.subr.mxu0 0.0
    %907 = vmatpush1.msra.mxu0 0.0
    %908 = vmatprep.subr.mxu0 0.0
    %909 = vmatpush1.msra.mxu0 0.0
    %910 = vmatprep.subr.mxu0 0.0
    %911 = vmatpush1.msra.mxu0 0.0
    %912 = vmatprep.subr.mxu0 0.0
    %913 = vmatpush1.msra.mxu0 0.0
    %914 = vmatprep.subr.mxu0 0.0
    %915 = vmatpush1.msra.mxu0 0.0
    %916 = vmatprep.subr.mxu0 0.0
    %917 = vmatpush1.msra.mxu0 0.0
    %918 = vmatprep.subr.mxu0 0.0
    %919 = vmatpush1.msra.mxu0 0.0
    %920 = vmatprep.subr.mxu0 0.0
    %921 = vmatpush1.msra.mxu0 0.0
    %922 = vmatprep.subr.mxu0 0.0
    %923 = vmatpush1.msra.mxu0 0.0
    %924 = vmatprep.subr.mxu0 0.0
    %925 = vmatpush1.msra.mxu0 0.0
    %926 = vmatprep.subr.mxu0 0.0
    %927 = vmatpush1.msra.mxu0 0.0
    %928 = vmatprep.subr.mxu0 0.0
    %929 = vmatpush1.msra.mxu0 0.0
    %930 = vmatprep.subr.mxu0 0.0
    %931 = vmatpush1.msra.mxu0 0.0
    %932 = vmatprep.subr.mxu0 0.0
    %933 = vmatpush1.msra.mxu0 0.0
    %934 = vmatprep.mubr.f32.mxu0 0.0
    %935 = vmatmul.mubr.f32.gmra.mrb[0].mxu0 %v853
    %v936 = vpop.f32.mrb[0].mxu0
    %v937 = vadd.f32 0.0, %v936
    %v938 = vpop.f32.mrb[0].mxu0
    %v939 = vadd.f32 0.0, %v938
    %940 = vmatprep.mubr.f32.mxu0 0.0
    %941 = vmatmul.mubr.f32.gmra.mrb[0].mxu0 %v856
    %v942 = vpop.f32.mrb[0].mxu0
    %v943 = vadd.f32 0.0, %v942
    %v944 = vpop.f32.mrb[0].mxu0
    %v945 = vadd.f32 0.0, %v944
    %946 = vdwg.mxu0
    %947 = vmatprep.subr.mxu0 %v847
    %948 = vmatpush1.msra.mxu0 %v846
    %949 = vmatprep.subr.mxu0 %v868
    %950 = vmatpush1.msra.mxu0 %v865
    %951 = vmatprep.subr.mxu0 0.0
    %952 = vmatpush1.msra.mxu0 0.0
    %953 = vmatprep.subr.mxu0 0.0
    %954 = vmatpush1.msra.mxu0 0.0
    %955 = vmatprep.subr.mxu0 0.0
    %956 = vmatpush1.msra.mxu0 0.0
    %957 = vmatprep.subr.mxu0 0.0
    %958 = vmatpush1.msra.mxu0 0.0
    %959 = vmatprep.subr.mxu0 0.0
    %960 = vmatpush1.msra.mxu0 0.0
    %961 = vmatprep.subr.mxu0 0.0
    %962 = vmatpush1.msra.mxu0 0.0
    %963 = vmatprep.subr.mxu0 0.0
    %964 = vmatpush1.msra.mxu0 0.0
    %965 = vmatprep.subr.mxu0 0.0
    %966 = vmatpush1.msra.mxu0 0.0
    %967 = vmatprep.subr.mxu0 0.0
    %968 = vmatpush1.msra.mxu0 0.0
    %969 = vmatprep.subr.mxu0 0.0
    %970 = vmatpush1.msra.mxu0 0.0
    %971 = vmatprep.subr.mxu0 0.0
    %972 = vmatpush1.msra.mxu0 0.0
    %973 = vmatprep.subr.mxu0 0.0
    %974 = vmatpush1.msra.mxu0 0.0
    %975 = vmatprep.subr.mxu0 0.0
    %976 = vmatpush1.msra.mxu0 0.0
    %977 = vmatprep.subr.mxu0 0.0
    %978 = vmatpush1.msra.mxu0 0.0
    %979 = vmatprep.subr.mxu0 0.0
    %980 = vmatpush1.msra.mxu0 0.0
    %981 = vmatprep.subr.mxu0 0.0
    %982 = vmatpush1.msra.mxu0 0.0
    %983 = vmatprep.subr.mxu0 0.0
    %984 = vmatpush1.msra.mxu0 0.0
    %985 = vmatprep.subr.mxu0 0.0
    %986 = vmatpush1.msra.mxu0 0.0
    %987 = vmatprep.subr.mxu0 0.0
    %988 = vmatpush1.msra.mxu0 0.0
    %989 = vmatprep.subr.mxu0 0.0
    %990 = vmatpush1.msra.mxu0 0.0
    %991 = vmatprep.subr.mxu0 0.0
    %992 = vmatpush1.msra.mxu0 0.0
    %993 = vmatprep.subr.mxu0 0.0
    %994 = vmatpush1.msra.mxu0 0.0
    %995 = vmatprep.subr.mxu0 0.0
    %996 = vmatpush1.msra.mxu0 0.0
    %997 = vmatprep.subr.mxu0 0.0
    %998 = vmatpush1.msra.mxu0 0.0
    %999 = vmatprep.subr.mxu0 0.0
    %1000 = vmatpush1.msra.mxu0 0.0
    %1001 = vmatprep.subr.mxu0 0.0
    %1002 = vmatpush1.msra.mxu0 0.0
    %1003 = vmatprep.subr.mxu0 0.0
    %1004 = vmatpush1.msra.mxu0 0.0
    %1005 = vmatprep.subr.mxu0 0.0
    %1006 = vmatpush1.msra.mxu0 0.0
    %1007 = vmatprep.subr.mxu0 0.0
    %1008 = vmatpush1.msra.mxu0 0.0
    %1009 = vmatprep.subr.mxu0 0.0
    %1010 = vmatpush1.msra.mxu0 0.0
    %1011 = vmatprep.mubr.f32.mxu0 0.0
    %1012 = vmatmul.mubr.f32.gmra.mrb[0].mxu0 %v853
    %v1013 = vpop.f32.mrb[0].mxu0
    %v1014 = vadd.f32 0.0, %v1013
    %v1015 = vpop.f32.mrb[0].mxu0
    %v1016 = vadd.f32 0.0, %v1015
    %1017 = vmatprep.mubr.f32.mxu0 0.0
    %1018 = vmatmul.mubr.f32.gmra.mrb[0].mxu0 %v856
    %v1019 = vpop.f32.mrb[0].mxu0
    %v1020 = vadd.f32 0.0, %v1019
    %v1021 = vpop.f32.mrb[0].mxu0
    %v1022 = vadd.f32 0.0, %v1021
    %1023 = vdwg.mxu0
    %v1024 = vmul.f32 %v937, 0.5
    %v1025 = vmul.f32 %v943, 0.5
    %v1026 = vtanh.pop %v1024
    %v1027 = vtanh.pop %v1025
    %v1028 = vmul.f32 %v1026, 0.5
    %v1029 = vmul.f32 %v1027, 0.5
    %v1030 = vadd.f32 %v1028, 0.5
    %v1031 = vadd.f32 %v1029, 0.5
    %v1032 = vmul.f32 %v1030, %v1030
    %v1033 = vmul.f32 %v1031, %v1031
    %v1034 = vsub.f32 %v1030, %v1032
    %v1035 = vsub.f32 %v1031, %v1033
    %v1036 = vmul.f32 %v1030, %v1034
    %v1037 = vmul.f32 %v1031, %v1035
    %v1038 = vmul.f32 %v1036, 2.0
    %v1039 = vmul.f32 %v1037, 2.0
    %v1040 = vsub.f32 %v1034, %v1038
    %v1041 = vsub.f32 %v1035, %v1039
    %1042 = vst [vmem:[#allocation2] sm:$0xff] %v1030
    %1043 = vst [vmem:[#allocation2 + $0x20] sm:$0x3] %v1031
    %v1044 = vmul.f32 %v1034, %v939
    %v1045 = vmul.f32 %v1035, %v945
    %1046 = vst [vmem:[#allocation2 + $0x8] sm:$0xff] %v1044
    %1047 = vst [vmem:[#allocation2 + $0x28] sm:$0x3] %v1045
    %v1048 = vmul.f32 %v1034, %v1014
    %v1049 = vmul.f32 %v1035, %v1020
    %1050 = vst [vmem:[#allocation2 + $0x10] sm:$0xff] %v1048
    %1051 = vst [vmem:[#allocation2 + $0x30] sm:$0x3] %v1049
    %v1052 = vmul.f32 %v1014, %v1014
    %v1053 = vmul.f32 %v1020, %v1020
    %v1054 = vmul.f32 %v1040, %v1052
    %v1055 = vmul.f32 %v1041, %v1053
    %v1056 = vmul.f32 %v1034, %v1016
    %v1057 = vmul.f32 %v1035, %v1022
    %v1058 = vadd.f32 %v1054, %v1056
    %v1059 = vadd.f32 %v1055, %v1057
    %1060 = vst [vmem:[#allocation2 + $0x18] sm:$0xff] %v1058
    %1061 = vst [vmem:[#allocation2 + $0x38] sm:$0x3] %v1059
    %s1062 = scalar_lea.vmem %s2, 64
    %v1063 = vld [vmem:[%s1062] sm:$0xff]
    %v1064 = vld [vmem:[%s1062 + $0x8] sm:$0x3]
    %v1065 = vld [vmem:[#allocation2] sm:$0xff]
    %v1066 = vld [vmem:[#allocation2 + $0x8] sm:$0xff]
    %v1067 = vld [vmem:[#allocation2 + $0x10] sm:$0xff]
    %v1068 = vld [vmem:[#allocation2 + $0x18] sm:$0xff]
    %v1069 = vld [vmem:[#allocation2 + $0x20] sm:$0x7]
    %v1070 = vld [vmem:[#allocation2 + $0x28] sm:$0x7]
    %v1071 = vld [vmem:[#allocation2 + $0x30] sm:$0x7]
    %v1072 = vld [vmem:[#allocation2 + $0x38] sm:$0x7]
    %v1074 = vsel %vm188, %v1063, 0
    %v1077 = vsel %vm188, %v1064, 0
    %v1080 = vsel %vm39, %v1069, 0
    %v1083 = vsel %vm39, %v1070, 0
    %v1086 = vsel %vm39, %v1071, 0
    %v1089 = vsel %vm39, %v1072, 0
    %1091 = vmatprep.subr.mxu0 %v1066
    %1092 = vmatpush1.msra.mxu0 %v1065
    %1093 = vmatprep.subr.mxu0 %v1083
    %1094 = vmatpush1.msra.mxu0 %v1080
    %1095 = vmatprep.subr.mxu0 0.0
    %1096 = vmatpush1.msra.mxu0 0.0
    %1097 = vmatprep.subr.mxu0 0.0
    %1098 = vmatpush1.msra.mxu0 0.0
    %1099 = vmatprep.subr.mxu0 0.0
    %1100 = vmatpush1.msra.mxu0 0.0
    %1101 = vmatprep.subr.mxu0 0.0
    %1102 = vmatpush1.msra.mxu0 0.0
    %1103 = vmatprep.subr.mxu0 0.0
    %1104 = vmatpush1.msra.mxu0 0.0
    %1105 = vmatprep.subr.mxu0 0.0
    %1106 = vmatpush1.msra.mxu0 0.0
    %1107 = vmatprep.subr.mxu0 0.0
    %1108 = vmatpush1.msra.mxu0 0.0
    %1109 = vmatprep.subr.mxu0 0.0
    %1110 = vmatpush1.msra.mxu0 0.0
    %1111 = vmatprep.subr.mxu0 0.0
    %1112 = vmatpush1.msra.mxu0 0.0
    %1113 = vmatprep.subr.mxu0 0.0
    %1114 = vmatpush1.msra.mxu0 0.0
    %1115 = vmatprep.subr.mxu0 0.0
    %1116 = vmatpush1.msra.mxu0 0.0
    %1117 = vmatprep.subr.mxu0 0.0
    %1118 = vmatpush1.msra.mxu0 0.0
    %1119 = vmatprep.subr.mxu0 0.0
    %1120 = vmatpush1.msra.mxu0 0.0
    %1121 = vmatprep.subr.mxu0 0.0
    %1122 = vmatpush1.msra.mxu0 0.0
    %1123 = vmatprep.subr.mxu0 0.0
    %1124 = vmatpush1.msra.mxu0 0.0
    %1125 = vmatprep.subr.mxu0 0.0
    %1126 = vmatpush1.msra.mxu0 0.0
    %1127 = vmatprep.subr.mxu0 0.0
    %1128 = vmatpush1.msra.mxu0 0.0
    %1129 = vmatprep.subr.mxu0 0.0
    %1130 = vmatpush1.msra.mxu0 0.0
    %1131 = vmatprep.subr.mxu0 0.0
    %1132 = vmatpush1.msra.mxu0 0.0
    %1133 = vmatprep.subr.mxu0 0.0
    %1134 = vmatpush1.msra.mxu0 0.0
    %1135 = vmatprep.subr.mxu0 0.0
    %1136 = vmatpush1.msra.mxu0 0.0
    %1137 = vmatprep.subr.mxu0 0.0
    %1138 = vmatpush1.msra.mxu0 0.0
    %1139 = vmatprep.subr.mxu0 0.0
    %1140 = vmatpush1.msra.mxu0 0.0
    %1141 = vmatprep.subr.mxu0 0.0
    %1142 = vmatpush1.msra.mxu0 0.0
    %1143 = vmatprep.subr.mxu0 0.0
    %1144 = vmatpush1.msra.mxu0 0.0
    %1145 = vmatprep.subr.mxu0 0.0
    %1146 = vmatpush1.msra.mxu0 0.0
    %1147 = vmatprep.subr.mxu0 0.0
    %1148 = vmatpush1.msra.mxu0 0.0
    %1149 = vmatprep.subr.mxu0 0.0
    %1150 = vmatpush1.msra.mxu0 0.0
    %1151 = vmatprep.subr.mxu0 0.0
    %1152 = vmatpush1.msra.mxu0 0.0
    %1153 = vmatprep.subr.mxu0 0.0
    %1154 = vmatpush1.msra.mxu0 0.0
    %1155 = vmatprep.mubr.f32.mxu0 0.0
    %1156 = vmatmul.mubr.f32.gmra.mrb[0].mxu0 %v1074
    %v1157 = vpop.f32.mrb[0].mxu0
    %v1158 = vadd.f32 0.0, %v1157
    %v1159 = vpop.f32.mrb[0].mxu0
    %v1160 = vadd.f32 0.0, %v1159
    %1161 = vmatprep.mubr.f32.mxu0 0.0
    %1162 = vmatmul.mubr.f32.gmra.mrb[0].mxu0 %v1077
    %v1163 = vpop.f32.mrb[0].mxu0
    %v1164 = vadd.f32 0.0, %v1163
    %v1165 = vpop.f32.mrb[0].mxu0
    %v1166 = vadd.f32 0.0, %v1165
    %1167 = vdwg.mxu0
    %1168 = vmatprep.subr.mxu0 %v1068
    %1169 = vmatpush1.msra.mxu0 %v1067
    %1170 = vmatprep.subr.mxu0 %v1089
    %1171 = vmatpush1.msra.mxu0 %v1086
    %1172 = vmatprep.subr.mxu0 0.0
    %1173 = vmatpush1.msra.mxu0 0.0
    %1174 = vmatprep.subr.mxu0 0.0
    %1175 = vmatpush1.msra.mxu0 0.0
    %1176 = vmatprep.subr.mxu0 0.0
    %1177 = vmatpush1.msra.mxu0 0.0
    %1178 = vmatprep.subr.mxu0 0.0
    %1179 = vmatpush1.msra.mxu0 0.0
    %1180 = vmatprep.subr.mxu0 0.0
    %1181 = vmatpush1.msra.mxu0 0.0
    %1182 = vmatprep.subr.mxu0 0.0
    %1183 = vmatpush1.msra.mxu0 0.0
    %1184 = vmatprep.subr.mxu0 0.0
    %1185 = vmatpush1.msra.mxu0 0.0
    %1186 = vmatprep.subr.mxu0 0.0
    %1187 = vmatpush1.msra.mxu0 0.0
    %1188 = vmatprep.subr.mxu0 0.0
    %1189 = vmatpush1.msra.mxu0 0.0
    %1190 = vmatprep.subr.mxu0 0.0
    %1191 = vmatpush1.msra.mxu0 0.0
    %1192 = vmatprep.subr.mxu0 0.0
    %1193 = vmatpush1.msra.mxu0 0.0
    %1194 = vmatprep.subr.mxu0 0.0
    %1195 = vmatpush1.msra.mxu0 0.0
    %1196 = vmatprep.subr.mxu0 0.0
    %1197 = vmatpush1.msra.mxu0 0.0
    %1198 = vmatprep.subr.mxu0 0.0
    %1199 = vmatpush1.msra.mxu0 0.0
    %1200 = vmatprep.subr.mxu0 0.0
    %1201 = vmatpush1.msra.mxu0 0.0
    %1202 = vmatprep.subr.mxu0 0.0
    %1203 = vmatpush1.msra.mxu0 0.0
    %1204 = vmatprep.subr.mxu0 0.0
    %1205 = vmatpush1.msra.mxu0 0.0
    %1206 = vmatprep.subr.mxu0 0.0
    %1207 = vmatpush1.msra.mxu0 0.0
    %1208 = vmatprep.subr.mxu0 0.0
    %1209 = vmatpush1.msra.mxu0 0.0
    %1210 = vmatprep.subr.mxu0 0.0
    %1211 = vmatpush1.msra.mxu0 0.0
    %1212 = vmatprep.subr.mxu0 0.0
    %1213 = vmatpush1.msra.mxu0 0.0
    %1214 = vmatprep.subr.mxu0 0.0
    %1215 = vmatpush1.msra.mxu0 0.0
    %1216 = vmatprep.subr.mxu0 0.0
    %1217 = vmatpush1.msra.mxu0 0.0
    %1218 = vmatprep.subr.mxu0 0.0
    %1219 = vmatpush1.msra.mxu0 0.0
    %1220 = vmatprep.subr.mxu0 0.0
    %1221 = vmatpush1.msra.mxu0 0.0
    %1222 = vmatprep.subr.mxu0 0.0
    %1223 = vmatpush1.msra.mxu0 0.0
    %1224 = vmatprep.subr.mxu0 0.0
    %1225 = vmatpush1.msra.mxu0 0.0
    %1226 = vmatprep.subr.mxu0 0.0
    %1227 = vmatpush1.msra.mxu0 0.0
    %1228 = vmatprep.subr.mxu0 0.0
    %1229 = vmatpush1.msra.mxu0 0.0
    %1230 = vmatprep.subr.mxu0 0.0
    %1231 = vmatpush1.msra.mxu0 0.0
    %1232 = vmatprep.mubr.f32.mxu0 0.0
    %1233 = vmatmul.mubr.f32.gmra.mrb[0].mxu0 %v1074
    %v1234 = vpop.f32.mrb[0].mxu0
    %v1235 = vadd.f32 0.0, %v1234
    %v1236 = vpop.f32.mrb[0].mxu0
    %v1237 = vadd.f32 0.0, %v1236
    %1238 = vmatprep.mubr.f32.mxu0 0.0
    %1239 = vmatmul.mubr.f32.gmra.mrb[0].mxu0 %v1077
    %v1240 = vpop.f32.mrb[0].mxu0
    %v1241 = vadd.f32 0.0, %v1240
    %v1242 = vpop.f32.mrb[0].mxu0
    %v1243 = vadd.f32 0.0, %v1242
    %1244 = vdwg.mxu0
    %v1245 = vmul.f32 %v1158, 0.5
    %v1246 = vmul.f32 %v1164, 0.5
    %v1247 = vtanh.pop %v1245
    %v1248 = vtanh.pop %v1246
    %v1249 = vmul.f32 %v1247, 0.5
    %v1250 = vmul.f32 %v1248, 0.5
    %v1251 = vadd.f32 %v1249, 0.5
    %v1252 = vadd.f32 %v1250, 0.5
    %v1253 = vmul.f32 %v1251, %v1251
    %v1254 = vmul.f32 %v1252, %v1252
    %v1255 = vsub.f32 %v1251, %v1253
    %v1256 = vsub.f32 %v1252, %v1254
    %v1257 = vmul.f32 %v1251, %v1255
    %v1258 = vmul.f32 %v1252, %v1256
    %v1259 = vmul.f32 %v1257, 2.0
    %v1260 = vmul.f32 %v1258, 2.0
    %v1261 = vsub.f32 %v1255, %v1259
    %v1262 = vsub.f32 %v1256, %v1260
    %1263 = vst [vmem:[#allocation2] sm:$0xff] %v1251
    %1264 = vst [vmem:[#allocation2 + $0x20] sm:$0x3] %v1252
    %v1265 = vmul.f32 %v1255, %v1160
    %v1266 = vmul.f32 %v1256, %v1166
    %1267 = vst [vmem:[#allocation2 + $0x8] sm:$0xff] %v1265
    %1268 = vst [vmem:[#allocation2 + $0x28] sm:$0x3] %v1266
    %v1269 = vmul.f32 %v1255, %v1235
    %v1270 = vmul.f32 %v1256, %v1241
    %1271 = vst [vmem:[#allocation2 + $0x10] sm:$0xff] %v1269
    %1272 = vst [vmem:[#allocation2 + $0x30] sm:$0x3] %v1270
    %v1273 = vmul.f32 %v1235, %v1235
    %v1274 = vmul.f32 %v1241, %v1241
    %v1275 = vmul.f32 %v1261, %v1273
    %v1276 = vmul.f32 %v1262, %v1274
    %v1277 = vmul.f32 %v1255, %v1237
    %v1278 = vmul.f32 %v1256, %v1243
    %v1279 = vadd.f32 %v1275, %v1277
    %v1280 = vadd.f32 %v1276, %v1278
    %1281 = vst [vmem:[#allocation2 + $0x18] sm:$0xff] %v1279
    %1282 = vst [vmem:[#allocation2 + $0x38] sm:$0x3] %v1280
    %s1283 = scalar_lea.vmem %s2, 80
    %v1284 = vld [vmem:[%s1283] sm:$0xff]
    %v1285 = vld [vmem:[%s1283 + $0x8] sm:$0x3]
    %v1286 = vld [vmem:[#allocation2] sm:$0xff]
    %v1287 = vld [vmem:[#allocation2 + $0x8] sm:$0xff]
    %v1288 = vld [vmem:[#allocation2 + $0x10] sm:$0xff]
    %v1289 = vld [vmem:[#allocation2 + $0x18] sm:$0xff]
    %v1290 = vld [vmem:[#allocation2 + $0x20] sm:$0x7]
    %v1291 = vld [vmem:[#allocation2 + $0x28] sm:$0x7]
    %v1292 = vld [vmem:[#allocation2 + $0x30] sm:$0x7]
    %v1293 = vld [vmem:[#allocation2 + $0x38] sm:$0x7]
    %v1295 = vsel %vm188, %v1284, 0
    %v1298 = vsel %vm188, %v1285, 0
    %v1301 = vsel %vm39, %v1290, 0
    %v1304 = vsel %vm39, %v1291, 0
    %v1307 = vsel %vm39, %v1292, 0
    %v1310 = vsel %vm39, %v1293, 0
    %1312 = vmatprep.subr.mxu0 %v1287
    %1313 = vmatpush1.msra.mxu0 %v1286
    %1314 = vmatprep.subr.mxu0 %v1304
    %1315 = vmatpush1.msra.mxu0 %v1301
    %1316 = vmatprep.subr.mxu0 0.0
    %1317 = vmatpush1.msra.mxu0 0.0
    %1318 = vmatprep.subr.mxu0 0.0
    %1319 = vmatpush1.msra.mxu0 0.0
    %1320 = vmatprep.subr.mxu0 0.0
    %1321 = vmatpush1.msra.mxu0 0.0
    %1322 = vmatprep.subr.mxu0 0.0
    %1323 = vmatpush1.msra.mxu0 0.0
    %1324 = vmatprep.subr.mxu0 0.0
    %1325 = vmatpush1.msra.mxu0 0.0
    %1326 = vmatprep.subr.mxu0 0.0
    %1327 = vmatpush1.msra.mxu0 0.0
    %1328 = vmatprep.subr.mxu0 0.0
    %1329 = vmatpush1.msra.mxu0 0.0
    %1330 = vmatprep.subr.mxu0 0.0
    %1331 = vmatpush1.msra.mxu0 0.0
    %1332 = vmatprep.subr.mxu0 0.0
    %1333 = vmatpush1.msra.mxu0 0.0
    %1334 = vmatprep.subr.mxu0 0.0
    %1335 = vmatpush1.msra.mxu0 0.0
    %1336 = vmatprep.subr.mxu0 0.0
    %1337 = vmatpush1.msra.mxu0 0.0
    %1338 = vmatprep.subr.mxu0 0.0
    %1339 = vmatpush1.msra.mxu0 0.0
    %1340 = vmatprep.subr.mxu0 0.0
    %1341 = vmatpush1.msra.mxu0 0.0
    %1342 = vmatprep.subr.mxu0 0.0
    %1343 = vmatpush1.msra.mxu0 0.0
    %1344 = vmatprep.subr.mxu0 0.0
    %1345 = vmatpush1.msra.mxu0 0.0
    %1346 = vmatprep.subr.mxu0 0.0
    %1347 = vmatpush1.msra.mxu0 0.0
    %1348 = vmatprep.subr.mxu0 0.0
    %1349 = vmatpush1.msra.mxu0 0.0
    %1350 = vmatprep.subr.mxu0 0.0
    %1351 = vmatpush1.msra.mxu0 0.0
    %1352 = vmatprep.subr.mxu0 0.0
    %1353 = vmatpush1.msra.mxu0 0.0
    %1354 = vmatprep.subr.mxu0 0.0
    %1355 = vmatpush1.msra.mxu0 0.0
    %1356 = vmatprep.subr.mxu0 0.0
    %1357 = vmatpush1.msra.mxu0 0.0
    %1358 = vmatprep.subr.mxu0 0.0
    %1359 = vmatpush1.msra.mxu0 0.0
    %1360 = vmatprep.subr.mxu0 0.0
    %1361 = vmatpush1.msra.mxu0 0.0
    %1362 = vmatprep.subr.mxu0 0.0
    %1363 = vmatpush1.msra.mxu0 0.0
    %1364 = vmatprep.subr.mxu0 0.0
    %1365 = vmatpush1.msra.mxu0 0.0
    %1366 = vmatprep.subr.mxu0 0.0
    %1367 = vmatpush1.msra.mxu0 0.0
    %1368 = vmatprep.subr.mxu0 0.0
    %1369 = vmatpush1.msra.mxu0 0.0
    %1370 = vmatprep.subr.mxu0 0.0
    %1371 = vmatpush1.msra.mxu0 0.0
    %1372 = vmatprep.subr.mxu0 0.0
    %1373 = vmatpush1.msra.mxu0 0.0
    %1374 = vmatprep.subr.mxu0 0.0
    %1375 = vmatpush1.msra.mxu0 0.0
    %1376 = vmatprep.mubr.f32.mxu0 0.0
    %1377 = vmatmul.mubr.f32.gmra.mrb[0].mxu0 %v1295
    %v1378 = vpop.f32.mrb[0].mxu0
    %v1379 = vadd.f32 0.0, %v1378
    %v1380 = vpop.f32.mrb[0].mxu0
    %v1381 = vadd.f32 0.0, %v1380
    %1382 = vmatprep.mubr.f32.mxu0 0.0
    %1383 = vmatmul.mubr.f32.gmra.mrb[0].mxu0 %v1298
    %v1384 = vpop.f32.mrb[0].mxu0
    %v1385 = vadd.f32 0.0, %v1384
    %v1386 = vpop.f32.mrb[0].mxu0
    %v1387 = vadd.f32 0.0, %v1386
    %1388 = vdwg.mxu0
    %1389 = vmatprep.subr.mxu0 %v1289
    %1390 = vmatpush1.msra.mxu0 %v1288
    %1391 = vmatprep.subr.mxu0 %v1310
    %1392 = vmatpush1.msra.mxu0 %v1307
    %1393 = vmatprep.subr.mxu0 0.0
    %1394 = vmatpush1.msra.mxu0 0.0
    %1395 = vmatprep.subr.mxu0 0.0
    %1396 = vmatpush1.msra.mxu0 0.0
    %1397 = vmatprep.subr.mxu0 0.0
    %1398 = vmatpush1.msra.mxu0 0.0
    %1399 = vmatprep.subr.mxu0 0.0
    %1400 = vmatpush1.msra.mxu0 0.0
    %1401 = vmatprep.subr.mxu0 0.0
    %1402 = vmatpush1.msra.mxu0 0.0
    %1403 = vmatprep.subr.mxu0 0.0
    %1404 = vmatpush1.msra.mxu0 0.0
    %1405 = vmatprep.subr.mxu0 0.0
    %1406 = vmatpush1.msra.mxu0 0.0
    %1407 = vmatprep.subr.mxu0 0.0
    %1408 = vmatpush1.msra.mxu0 0.0
    %1409 = vmatprep.subr.mxu0 0.0
    %1410 = vmatpush1.msra.mxu0 0.0
    %1411 = vmatprep.subr.mxu0 0.0
    %1412 = vmatpush1.msra.mxu0 0.0
    %1413 = vmatprep.subr.mxu0 0.0
    %1414 = vmatpush1.msra.mxu0 0.0
    %1415 = vmatprep.subr.mxu0 0.0
    %1416 = vmatpush1.msra.mxu0 0.0
    %1417 = vmatprep.subr.mxu0 0.0
    %1418 = vmatpush1.msra.mxu0 0.0
    %1419 = vmatprep.subr.mxu0 0.0
    %1420 = vmatpush1.msra.mxu0 0.0
    %1421 = vmatprep.subr.mxu0 0.0
    %1422 = vmatpush1.msra.mxu0 0.0
    %1423 = vmatprep.subr.mxu0 0.0
    %1424 = vmatpush1.msra.mxu0 0.0
    %1425 = vmatprep.subr.mxu0 0.0
    %1426 = vmatpush1.msra.mxu0 0.0
    %1427 = vmatprep.subr.mxu0 0.0
    %1428 = vmatpush1.msra.mxu0 0.0
    %1429 = vmatprep.subr.mxu0 0.0
    %1430 = vmatpush1.msra.mxu0 0.0
    %1431 = vmatprep.subr.mxu0 0.0
    %1432 = vmatpush1.msra.mxu0 0.0
    %1433 = vmatprep.subr.mxu0 0.0
    %1434 = vmatpush1.msra.mxu0 0.0
    %1435 = vmatprep.subr.mxu0 0.0
    %1436 = vmatpush1.msra.mxu0 0.0
    %1437 = vmatprep.subr.mxu0 0.0
    %1438 = vmatpush1.msra.mxu0 0.0
    %1439 = vmatprep.subr.mxu0 0.0
    %1440 = vmatpush1.msra.mxu0 0.0
    %1441 = vmatprep.subr.mxu0 0.0
    %1442 = vmatpush1.msra.mxu0 0.0
    %1443 = vmatprep.subr.mxu0 0.0
    %1444 = vmatpush1.msra.mxu0 0.0
    %1445 = vmatprep.subr.mxu0 0.0
    %1446 = vmatpush1.msra.mxu0 0.0
    %1447 = vmatprep.subr.mxu0 0.0
    %1448 = vmatpush1.msra.mxu0 0.0
    %1449 = vmatprep.subr.mxu0 0.0
    %1450 = vmatpush1.msra.mxu0 0.0
    %1451 = vmatprep.subr.mxu0 0.0
    %1452 = vmatpush1.msra.mxu0 0.0
    %1453 = vmatprep.mubr.f32.mxu0 0.0
    %1454 = vmatmul.mubr.f32.gmra.mrb[0].mxu0 %v1295
    %v1455 = vpop.f32.mrb[0].mxu0
    %v1456 = vadd.f32 0.0, %v1455
    %v1457 = vpop.f32.mrb[0].mxu0
    %v1458 = vadd.f32 0.0, %v1457
    %1459 = vmatprep.mubr.f32.mxu0 0.0
    %1460 = vmatmul.mubr.f32.gmra.mrb[0].mxu0 %v1298
    %v1461 = vpop.f32.mrb[0].mxu0
    %v1462 = vadd.f32 0.0, %v1461
    %v1463 = vpop.f32.mrb[0].mxu0
    %v1464 = vadd.f32 0.0, %v1463
    %1465 = vdwg.mxu0
    %v1466 = vmul.f32 %v1379, 0.5
    %v1467 = vmul.f32 %v1385, 0.5
    %v1468 = vtanh.pop %v1466
    %v1469 = vtanh.pop %v1467
    %v1470 = vmul.f32 %v1468, 0.5
    %v1471 = vmul.f32 %v1469, 0.5
    %v1472 = vadd.f32 %v1470, 0.5
    %v1473 = vadd.f32 %v1471, 0.5
    %v1474 = vmul.f32 %v1472, %v1472
    %v1475 = vmul.f32 %v1473, %v1473
    %v1476 = vsub.f32 %v1472, %v1474
    %v1477 = vsub.f32 %v1473, %v1475
    %v1478 = vmul.f32 %v1472, %v1476
    %v1479 = vmul.f32 %v1473, %v1477
    %v1480 = vmul.f32 %v1478, 2.0
    %v1481 = vmul.f32 %v1479, 2.0
    %v1482 = vsub.f32 %v1476, %v1480
    %v1483 = vsub.f32 %v1477, %v1481
    %1484 = vst [vmem:[#allocation2] sm:$0xff] %v1472
    %1485 = vst [vmem:[#allocation2 + $0x20] sm:$0x3] %v1473
    %v1486 = vmul.f32 %v1476, %v1381
    %v1487 = vmul.f32 %v1477, %v1387
    %1488 = vst [vmem:[#allocation2 + $0x8] sm:$0xff] %v1486
    %1489 = vst [vmem:[#allocation2 + $0x28] sm:$0x3] %v1487
    %v1490 = vmul.f32 %v1476, %v1456
    %v1491 = vmul.f32 %v1477, %v1462
    %1492 = vst [vmem:[#allocation2 + $0x10] sm:$0xff] %v1490
    %1493 = vst [vmem:[#allocation2 + $0x30] sm:$0x3] %v1491
    %v1494 = vmul.f32 %v1456, %v1456
    %v1495 = vmul.f32 %v1462, %v1462
    %v1496 = vmul.f32 %v1482, %v1494
    %v1497 = vmul.f32 %v1483, %v1495
    %v1498 = vmul.f32 %v1476, %v1458
    %v1499 = vmul.f32 %v1477, %v1464
    %v1500 = vadd.f32 %v1496, %v1498
    %v1501 = vadd.f32 %v1497, %v1499
    %1502 = vst [vmem:[#allocation2 + $0x18] sm:$0xff] %v1500
    %1503 = vst [vmem:[#allocation2 + $0x38] sm:$0x3] %v1501
    %s1504 = scalar_lea.vmem %s2, 96
    %v1505 = vld [vmem:[%s1504] sm:$0xff]
    %v1506 = vld [vmem:[%s1504 + $0x8] sm:$0x3]
    %v1507 = vld [vmem:[#allocation2] sm:$0xff]
    %v1508 = vld [vmem:[#allocation2 + $0x8] sm:$0xff]
    %v1509 = vld [vmem:[#allocation2 + $0x10] sm:$0xff]
    %v1510 = vld [vmem:[#allocation2 + $0x18] sm:$0xff]
    %v1511 = vld [vmem:[#allocation2 + $0x20] sm:$0x7]
    %v1512 = vld [vmem:[#allocation2 + $0x28] sm:$0x7]
    %v1513 = vld [vmem:[#allocation2 + $0x30] sm:$0x7]
    %v1514 = vld [vmem:[#allocation2 + $0x38] sm:$0x7]
    %v1516 = vsel %vm188, %v1505, 0
    %v1519 = vsel %vm188, %v1506, 0
    %v1522 = vsel %vm39, %v1511, 0
    %v1525 = vsel %vm39, %v1512, 0
    %v1528 = vsel %vm39, %v1513, 0
    %v1531 = vsel %vm39, %v1514, 0
    %1533 = vmatprep.subr.mxu0 %v1508
    %1534 = vmatpush1.msra.mxu0 %v1507
    %1535 = vmatprep.subr.mxu0 %v1525
    %1536 = vmatpush1.msra.mxu0 %v1522
    %1537 = vmatprep.subr.mxu0 0.0
    %1538 = vmatpush1.msra.mxu0 0.0
    %1539 = vmatprep.subr.mxu0 0.0
    %1540 = vmatpush1.msra.mxu0 0.0
    %1541 = vmatprep.subr.mxu0 0.0
    %1542 = vmatpush1.msra.mxu0 0.0
    %1543 = vmatprep.subr.mxu0 0.0
    %1544 = vmatpush1.msra.mxu0 0.0
    %1545 = vmatprep.subr.mxu0 0.0
    %1546 = vmatpush1.msra.mxu0 0.0
    %1547 = vmatprep.subr.mxu0 0.0
    %1548 = vmatpush1.msra.mxu0 0.0
    %1549 = vmatprep.subr.mxu0 0.0
    %1550 = vmatpush1.msra.mxu0 0.0
    %1551 = vmatprep.subr.mxu0 0.0
    %1552 = vmatpush1.msra.mxu0 0.0
    %1553 = vmatprep.subr.mxu0 0.0
    %1554 = vmatpush1.msra.mxu0 0.0
    %1555 = vmatprep.subr.mxu0 0.0
    %1556 = vmatpush1.msra.mxu0 0.0
    %1557 = vmatprep.subr.mxu0 0.0
    %1558 = vmatpush1.msra.mxu0 0.0
    %1559 = vmatprep.subr.mxu0 0.0
    %1560 = vmatpush1.msra.mxu0 0.0
    %1561 = vmatprep.subr.mxu0 0.0
    %1562 = vmatpush1.msra.mxu0 0.0
    %1563 = vmatprep.subr.mxu0 0.0
    %1564 = vmatpush1.msra.mxu0 0.0
    %1565 = vmatprep.subr.mxu0 0.0
    %1566 = vmatpush1.msra.mxu0 0.0
    %1567 = vmatprep.subr.mxu0 0.0
    %1568 = vmatpush1.msra.mxu0 0.0
    %1569 = vmatprep.subr.mxu0 0.0
    %1570 = vmatpush1.msra.mxu0 0.0
    %1571 = vmatprep.subr.mxu0 0.0
    %1572 = vmatpush1.msra.mxu0 0.0
    %1573 = vmatprep.subr.mxu0 0.0
    %1574 = vmatpush1.msra.mxu0 0.0
    %1575 = vmatprep.subr.mxu0 0.0
    %1576 = vmatpush1.msra.mxu0 0.0
    %1577 = vmatprep.subr.mxu0 0.0
    %1578 = vmatpush1.msra.mxu0 0.0
    %1579 = vmatprep.subr.mxu0 0.0
    %1580 = vmatpush1.msra.mxu0 0.0
    %1581 = vmatprep.subr.mxu0 0.0
    %1582 = vmatpush1.msra.mxu0 0.0
    %1583 = vmatprep.subr.mxu0 0.0
    %1584 = vmatpush1.msra.mxu0 0.0
    %1585 = vmatprep.subr.mxu0 0.0
    %1586 = vmatpush1.msra.mxu0 0.0
    %1587 = vmatprep.subr.mxu0 0.0
    %1588 = vmatpush1.msra.mxu0 0.0
    %1589 = vmatprep.subr.mxu0 0.0
    %1590 = vmatpush1.msra.mxu0 0.0
    %1591 = vmatprep.subr.mxu0 0.0
    %1592 = vmatpush1.msra.mxu0 0.0
    %1593 = vmatprep.subr.mxu0 0.0
    %1594 = vmatpush1.msra.mxu0 0.0
    %1595 = vmatprep.subr.mxu0 0.0
    %1596 = vmatpush1.msra.mxu0 0.0
    %1597 = vmatprep.mubr.f32.mxu0 0.0
    %1598 = vmatmul.mubr.f32.gmra.mrb[0].mxu0 %v1516
    %v1599 = vpop.f32.mrb[0].mxu0
    %v1600 = vadd.f32 0.0, %v1599
    %v1601 = vpop.f32.mrb[0].mxu0
    %v1602 = vadd.f32 0.0, %v1601
    %1603 = vmatprep.mubr.f32.mxu0 0.0
    %1604 = vmatmul.mubr.f32.gmra.mrb[0].mxu0 %v1519
    %v1605 = vpop.f32.mrb[0].mxu0
    %v1606 = vadd.f32 0.0, %v1605
    %v1607 = vpop.f32.mrb[0].mxu0
    %v1608 = vadd.f32 0.0, %v1607
    %1609 = vdwg.mxu0
    %1610 = vmatprep.subr.mxu0 %v1510
    %1611 = vmatpush1.msra.mxu0 %v1509
    %1612 = vmatprep.subr.mxu0 %v1531
    %1613 = vmatpush1.msra.mxu0 %v1528
    %1614 = vmatprep.subr.mxu0 0.0
    %1615 = vmatpush1.msra.mxu0 0.0
    %1616 = vmatprep.subr.mxu0 0.0
    %1617 = vmatpush1.msra.mxu0 0.0
    %1618 = vmatprep.subr.mxu0 0.0
    %1619 = vmatpush1.msra.mxu0 0.0
    %1620 = vmatprep.subr.mxu0 0.0
    %1621 = vmatpush1.msra.mxu0 0.0
    %1622 = vmatprep.subr.mxu0 0.0
    %1623 = vmatpush1.msra.mxu0 0.0
    %1624 = vmatprep.subr.mxu0 0.0
    %1625 = vmatpush1.msra.mxu0 0.0
    %1626 = vmatprep.subr.mxu0 0.0
    %1627 = vmatpush1.msra.mxu0 0.0
    %1628 = vmatprep.subr.mxu0 0.0
    %1629 = vmatpush1.msra.mxu0 0.0
    %1630 = vmatprep.subr.mxu0 0.0
    %1631 = vmatpush1.msra.mxu0 0.0
    %1632 = vmatprep.subr.mxu0 0.0
    %1633 = vmatpush1.msra.mxu0 0.0
    %1634 = vmatprep.subr.mxu0 0.0
    %1635 = vmatpush1.msra.mxu0 0.0
    %1636 = vmatprep.subr.mxu0 0.0
    %1637 = vmatpush1.msra.mxu0 0.0
    %1638 = vmatprep.subr.mxu0 0.0
    %1639 = vmatpush1.msra.mxu0 0.0
    %1640 = vmatprep.subr.mxu0 0.0
    %1641 = vmatpush1.msra.mxu0 0.0
    %1642 = vmatprep.subr.mxu0 0.0
    %1643 = vmatpush1.msra.mxu0 0.0
    %1644 = vmatprep.subr.mxu0 0.0
    %1645 = vmatpush1.msra.mxu0 0.0
    %1646 = vmatprep.subr.mxu0 0.0
    %1647 = vmatpush1.msra.mxu0 0.0
    %1648 = vmatprep.subr.mxu0 0.0
    %1649 = vmatpush1.msra.mxu0 0.0
    %1650 = vmatprep.subr.mxu0 0.0
    %1651 = vmatpush1.msra.mxu0 0.0
    %1652 = vmatprep.subr.mxu0 0.0
    %1653 = vmatpush1.msra.mxu0 0.0
    %1654 = vmatprep.subr.mxu0 0.0
    %1655 = vmatpush1.msra.mxu0 0.0
    %1656 = vmatprep.subr.mxu0 0.0
    %1657 = vmatpush1.msra.mxu0 0.0
    %1658 = vmatprep.subr.mxu0 0.0
    %1659 = vmatpush1.msra.mxu0 0.0
    %1660 = vmatprep.subr.mxu0 0.0
    %1661 = vmatpush1.msra.mxu0 0.0
    %1662 = vmatprep.subr.mxu0 0.0
    %1663 = vmatpush1.msra.mxu0 0.0
    %1664 = vmatprep.subr.mxu0 0.0
    %1665 = vmatpush1.msra.mxu0 0.0
    %1666 = vmatprep.subr.mxu0 0.0
    %1667 = vmatpush1.msra.mxu0 0.0
    %1668 = vmatprep.subr.mxu0 0.0
    %1669 = vmatpush1.msra.mxu0 0.0
    %1670 = vmatprep.subr.mxu0 0.0
    %1671 = vmatpush1.msra.mxu0 0.0
    %1672 = vmatprep.subr.mxu0 0.0
    %1673 = vmatpush1.msra.mxu0 0.0
    %1674 = vmatprep.mubr.f32.mxu0 0.0
    %1675 = vmatmul.mubr.f32.gmra.mrb[0].mxu0 %v1516
    %v1676 = vpop.f32.mrb[0].mxu0
    %v1677 = vadd.f32 0.0, %v1676
    %v1678 = vpop.f32.mrb[0].mxu0
    %v1679 = vadd.f32 0.0, %v1678
    %1680 = vmatprep.mubr.f32.mxu0 0.0
    %1681 = vmatmul.mubr.f32.gmra.mrb[0].mxu0 %v1519
    %v1682 = vpop.f32.mrb[0].mxu0
    %v1683 = vadd.f32 0.0, %v1682
    %v1684 = vpop.f32.mrb[0].mxu0
    %v1685 = vadd.f32 0.0, %v1684
    %1686 = vdwg.mxu0
    %v1687 = vmul.f32 %v1600, 0.5
    %v1688 = vmul.f32 %v1606, 0.5
    %v1689 = vtanh.pop %v1687
    %v1690 = vtanh.pop %v1688
    %v1691 = vmul.f32 %v1689, 0.5
    %v1692 = vmul.f32 %v1690, 0.5
    %v1693 = vadd.f32 %v1691, 0.5
    %v1694 = vadd.f32 %v1692, 0.5
    %v1695 = vmul.f32 %v1693, %v1693
    %v1696 = vmul.f32 %v1694, %v1694
    %v1697 = vsub.f32 %v1693, %v1695
    %v1698 = vsub.f32 %v1694, %v1696
    %v1699 = vmul.f32 %v1693, %v1697
    %v1700 = vmul.f32 %v1694, %v1698
    %v1701 = vmul.f32 %v1699, 2.0
    %v1702 = vmul.f32 %v1700, 2.0
    %v1703 = vsub.f32 %v1697, %v1701
    %v1704 = vsub.f32 %v1698, %v1702
    %1705 = vst [vmem:[#allocation2] sm:$0xff] %v1693
    %1706 = vst [vmem:[#allocation2 + $0x20] sm:$0x3] %v1694
    %v1707 = vmul.f32 %v1697, %v1602
    %v1708 = vmul.f32 %v1698, %v1608
    %1709 = vst [vmem:[#allocation2 + $0x8] sm:$0xff] %v1707
    %1710 = vst [vmem:[#allocation2 + $0x28] sm:$0x3] %v1708
    %v1711 = vmul.f32 %v1697, %v1677
    %v1712 = vmul.f32 %v1698, %v1683
    %1713 = vst [vmem:[#allocation2 + $0x10] sm:$0xff] %v1711
    %1714 = vst [vmem:[#allocation2 + $0x30] sm:$0x3] %v1712
    %v1715 = vmul.f32 %v1677, %v1677
    %v1716 = vmul.f32 %v1683, %v1683
    %v1717 = vmul.f32 %v1703, %v1715
    %v1718 = vmul.f32 %v1704, %v1716
    %v1719 = vmul.f32 %v1697, %v1679
    %v1720 = vmul.f32 %v1698, %v1685
    %v1721 = vadd.f32 %v1717, %v1719
    %v1722 = vadd.f32 %v1718, %v1720
    %1723 = vst [vmem:[#allocation2 + $0x18] sm:$0xff] %v1721
    %1724 = vst [vmem:[#allocation2 + $0x38] sm:$0x3] %v1722
    %v1725 = vld [vmem:[%s3] sm:$0x1]
    %v1726 = vld [vmem:[#allocation2] sm:$0xff]
    %v1727 = vld [vmem:[#allocation2 + $0x8] sm:$0xff]
    %v1728 = vld [vmem:[#allocation2 + $0x10] sm:$0xff]
    %v1729 = vld [vmem:[#allocation2 + $0x18] sm:$0xff]
    %v1730 = vld [vmem:[#allocation2 + $0x20] sm:$0x7]
    %v1731 = vld [vmem:[#allocation2 + $0x28] sm:$0x7]
    %v1732 = vld [vmem:[#allocation2 + $0x30] sm:$0x7]
    %v1733 = vld [vmem:[#allocation2 + $0x38] sm:$0x7]
    %v1735 = vsel %vm188, %v1725, 0
    %v1738 = vsel %vm39, %v1730, 0
    %v1741 = vsel %vm39, %v1731, 0
    %v1744 = vsel %vm39, %v1732, 0
    %v1747 = vsel %vm39, %v1733, 0
    %1749 = vmatprep.subr.mxu0 %v1727
    %1750 = vmatpush1.msra.mxu0 %v1726
    %1751 = vmatprep.subr.mxu0 %v1741
    %1752 = vmatpush1.msra.mxu0 %v1738
    %1753 = vmatprep.subr.mxu0 0.0
    %1754 = vmatpush1.msra.mxu0 0.0
    %1755 = vmatprep.subr.mxu0 0.0
    %1756 = vmatpush1.msra.mxu0 0.0
    %1757 = vmatprep.subr.mxu0 0.0
    %1758 = vmatpush1.msra.mxu0 0.0
    %1759 = vmatprep.subr.mxu0 0.0
    %1760 = vmatpush1.msra.mxu0 0.0
    %1761 = vmatprep.subr.mxu0 0.0
    %1762 = vmatpush1.msra.mxu0 0.0
    %1763 = vmatprep.subr.mxu0 0.0
    %1764 = vmatpush1.msra.mxu0 0.0
    %1765 = vmatprep.subr.mxu0 0.0
    %1766 = vmatpush1.msra.mxu0 0.0
    %1767 = vmatprep.subr.mxu0 0.0
    %1768 = vmatpush1.msra.mxu0 0.0
    %1769 = vmatprep.subr.mxu0 0.0
    %1770 = vmatpush1.msra.mxu0 0.0
    %1771 = vmatprep.subr.mxu0 0.0
    %1772 = vmatpush1.msra.mxu0 0.0
    %1773 = vmatprep.subr.mxu0 0.0
    %1774 = vmatpush1.msra.mxu0 0.0
    %1775 = vmatprep.subr.mxu0 0.0
    %1776 = vmatpush1.msra.mxu0 0.0
    %1777 = vmatprep.subr.mxu0 0.0
    %1778 = vmatpush1.msra.mxu0 0.0
    %1779 = vmatprep.subr.mxu0 0.0
    %1780 = vmatpush1.msra.mxu0 0.0
    %1781 = vmatprep.subr.mxu0 0.0
    %1782 = vmatpush1.msra.mxu0 0.0
    %1783 = vmatprep.subr.mxu0 0.0
    %1784 = vmatpush1.msra.mxu0 0.0
    %1785 = vmatprep.subr.mxu0 0.0
    %1786 = vmatpush1.msra.mxu0 0.0
    %1787 = vmatprep.subr.mxu0 0.0
    %1788 = vmatpush1.msra.mxu0 0.0
    %1789 = vmatprep.subr.mxu0 0.0
    %1790 = vmatpush1.msra.mxu0 0.0
    %1791 = vmatprep.subr.mxu0 0.0
    %1792 = vmatpush1.msra.mxu0 0.0
    %1793 = vmatprep.subr.mxu0 0.0
    %1794 = vmatpush1.msra.mxu0 0.0
    %1795 = vmatprep.subr.mxu0 0.0
    %1796 = vmatpush1.msra.mxu0 0.0
    %1797 = vmatprep.subr.mxu0 0.0
    %1798 = vmatpush1.msra.mxu0 0.0
    %1799 = vmatprep.subr.mxu0 0.0
    %1800 = vmatpush1.msra.mxu0 0.0
    %1801 = vmatprep.subr.mxu0 0.0
    %1802 = vmatpush1.msra.mxu0 0.0
    %1803 = vmatprep.subr.mxu0 0.0
    %1804 = vmatpush1.msra.mxu0 0.0
    %1805 = vmatprep.subr.mxu0 0.0
    %1806 = vmatpush1.msra.mxu0 0.0
    %1807 = vmatprep.subr.mxu0 0.0
    %1808 = vmatpush1.msra.mxu0 0.0
    %1809 = vmatprep.subr.mxu0 0.0
    %1810 = vmatpush1.msra.mxu0 0.0
    %1811 = vmatprep.subr.mxu0 0.0
    %1812 = vmatpush1.msra.mxu0 0.0
    %1813 = vmatprep.mubr.f32.mxu0 0.0
    %1814 = vmatmul.mubr.f32.gmra.mrb[0].mxu0 %v1735
    %v1815 = vpop.f32.mrb[0].mxu0
    %v1816 = vadd.f32 0.0, %v1815
    %v1817 = vpop.f32.mrb[0].mxu0
    %v1818 = vadd.f32 0.0, %v1817
    %1819 = vdwg.mxu0
    %1820 = vmatprep.subr.mxu0 %v1729
    %1821 = vmatpush1.msra.mxu0 %v1728
    %1822 = vmatprep.subr.mxu0 %v1747
    %1823 = vmatpush1.msra.mxu0 %v1744
    %1824 = vmatprep.subr.mxu0 0.0
    %1825 = vmatpush1.msra.mxu0 0.0
    %1826 = vmatprep.subr.mxu0 0.0
    %1827 = vmatpush1.msra.mxu0 0.0
    %1828 = vmatprep.subr.mxu0 0.0
    %1829 = vmatpush1.msra.mxu0 0.0
    %1830 = vmatprep.subr.mxu0 0.0
    %1831 = vmatpush1.msra.mxu0 0.0
    %1832 = vmatprep.subr.mxu0 0.0
    %1833 = vmatpush1.msra.mxu0 0.0
    %1834 = vmatprep.subr.mxu0 0.0
    %1835 = vmatpush1.msra.mxu0 0.0
    %1836 = vmatprep.subr.mxu0 0.0
    %1837 = vmatpush1.msra.mxu0 0.0
    %1838 = vmatprep.subr.mxu0 0.0
    %1839 = vmatpush1.msra.mxu0 0.0
    %1840 = vmatprep.subr.mxu0 0.0
    %1841 = vmatpush1.msra.mxu0 0.0
    %1842 = vmatprep.subr.mxu0 0.0
    %1843 = vmatpush1.msra.mxu0 0.0
    %1844 = vmatprep.subr.mxu0 0.0
    %1845 = vmatpush1.msra.mxu0 0.0
    %1846 = vmatprep.subr.mxu0 0.0
    %1847 = vmatpush1.msra.mxu0 0.0
    %1848 = vmatprep.subr.mxu0 0.0
    %1849 = vmatpush1.msra.mxu0 0.0
    %1850 = vmatprep.subr.mxu0 0.0
    %1851 = vmatpush1.msra.mxu0 0.0
    %1852 = vmatprep.subr.mxu0 0.0
    %1853 = vmatpush1.msra.mxu0 0.0
    %1854 = vmatprep.subr.mxu0 0.0
    %1855 = vmatpush1.msra.mxu0 0.0
    %1856 = vmatprep.subr.mxu0 0.0
    %1857 = vmatpush1.msra.mxu0 0.0
    %1858 = vmatprep.subr.mxu0 0.0
    %1859 = vmatpush1.msra.mxu0 0.0
    %1860 = vmatprep.subr.mxu0 0.0
    %1861 = vmatpush1.msra.mxu0 0.0
    %1862 = vmatprep.subr.mxu0 0.0
    %1863 = vmatpush1.msra.mxu0 0.0
    %1864 = vmatprep.subr.mxu0 0.0
    %1865 = vmatpush1.msra.mxu0 0.0
    %1866 = vmatprep.subr.mxu0 0.0
    %1867 = vmatpush1.msra.mxu0 0.0
    %1868 = vmatprep.subr.mxu0 0.0
    %1869 = vmatpush1.msra.mxu0 0.0
    %1870 = vmatprep.subr.mxu0 0.0
    %1871 = vmatpush1.msra.mxu0 0.0
    %1872 = vmatprep.subr.mxu0 0.0
    %1873 = vmatpush1.msra.mxu0 0.0
    %1874 = vmatprep.subr.mxu0 0.0
    %1875 = vmatpush1.msra.mxu0 0.0
    %1876 = vmatprep.subr.mxu0 0.0
    %1877 = vmatpush1.msra.mxu0 0.0
    %1878 = vmatprep.subr.mxu0 0.0
    %1879 = vmatpush1.msra.mxu0 0.0
    %1880 = vmatprep.subr.mxu0 0.0
    %1881 = vmatpush1.msra.mxu0 0.0
    %1882 = vmatprep.subr.mxu0 0.0
    %1883 = vmatpush1.msra.mxu0 0.0
    %1884 = vmatprep.mubr.f32.mxu0 0.0
    %1885 = vmatmul.mubr.f32.gmra.mrb[0].mxu0 %v1735
    %v1886 = vpop.f32.mrb[0].mxu0
    %v1887 = vadd.f32 0.0, %v1886
    %v1888 = vpop.f32.mrb[0].mxu0
    %v1889 = vadd.f32 0.0, %v1888
    %1890 = vdwg.mxu0
    %1891 = vst [vmem:[#allocation3] sm:$0x1] %v1816
    %v1892 = vmul.f32 %v1816, %v1887
    %v1893 = vadd.f32 %v1818, %v1892
    %v1894 = vmul.f32 %v1889, 0.003183099
    %v1895 = vsub.f32 %v1893, %v1894
    %1896 = vst [vmem:[#allocation5] sm:$0x1] %v1895
    // Predicated region
    $region18: #{tpu_custom_call.1} parent=1 // pred_check
      _
    $region19: #{tpu_custom_call.1} parent=1 // pred_check_branch
      %1898 = sbr.rel (0) target = $region21
    $region20: #{tpu_custom_call.1} parent=1 // pred_region
      %s1900 = ssub.s32 16, 16
      %1901 = vsyncadd [#allocation4], %s1900
      %s1903 = sshll.u32 [#allocation3], 4
      %s1904 = int_to_ptr.vmem [resolvable:$true] %s1903
      %1906 = dma.vmem_to_hbm [thread:$0]  %s1904, 16, %s4, [#allocation4]
    $region21: #{tpu_custom_call.1} parent=1 // pred_fallthru
      _
    // Predicated region
    $region22: #{tpu_custom_call.1} parent=1 // pred_check
      _
    $region23: #{tpu_custom_call.1} parent=1 // pred_check_branch
      %1908 = sbr.rel (0) target = $region25
    $region24: #{tpu_custom_call.1} parent=1 // pred_region
      %s1910 = ssub.s32 16, 16
      %1911 = vsyncadd [#allocation6], %s1910
      %s1913 = sshll.u32 [#allocation5], 4
      %s1914 = int_to_ptr.vmem [resolvable:$true] %s1913
      %1916 = dma.vmem_to_hbm [thread:$0]  %s1914, 16, %s5, [#allocation6]
    $region25: #{tpu_custom_call.1} parent=1 // pred_fallthru
      _
    // Predicated region
    $region26: #{tpu_custom_call.1} parent=1 // pred_check
      _
    $region27: #{tpu_custom_call.1} parent=1 // pred_check_branch
      %1918 = sbr.rel (0) target = $region29
    $region28: #{tpu_custom_call.1} parent=1 // pred_region
      %1919 = dma.done [#allocation4], 16
    $region29: #{tpu_custom_call.1} parent=1 // pred_fallthru
      _
    // Predicated region
    $region30: #{tpu_custom_call.1} parent=1 // pred_check
      _
    $region31: #{tpu_custom_call.1} parent=1 // pred_check_branch
      %1921 = sbr.rel (0) target = $region33
    $region32: #{tpu_custom_call.1} parent=1 // pred_region
      %1922 = dma.done [#allocation6], 16
    $region33: #{tpu_custom_call.1} parent=1 // pred_fallthru
      _
    %1923 = vsyncpa [#allocation4], 1
    %1924 = vsyncpa [#allocation6], 1

</llo_original>
